<compile_context>
chip_gen: v7x
topology: tpu7x:2x2x1
jax: 0.10.0
libtpu: 0.0.40
codegen_flags: <defaults>
</compile_context>

<pallas_src>
import functools
import math

import jax
import jax.numpy as jnp
from jax import lax
from jax.experimental import pallas as pl
from jax.experimental.pallas import tpu as pltpu


def _round_up(a, m):
    return (a + m - 1) // m * m


def _nbytes(shape, dtype):
    return math.prod(shape) * jnp.dtype(dtype).itemsize


# ----------------------------------------------------------------------------
# Kernel
# ----------------------------------------------------------------------------
def _attention_kernel(dec_ref, ctx_ref, mask_ref,
                      w_in_ref, w_out_ctx_ref, w_out_dec_ref, b_out_ref,
                      res_ref, attn_ref, ctx_in_ref, *, op_dtype):
    f32 = jnp.float32
    op = op_dtype
    bt, ty, dec_h = dec_ref.shape
    x_len = ctx_ref.shape[1]

    # In-kernel cast to the matmul dtype (activations arrive as f32 blocks).
    dec_out = dec_ref[...].astype(op)          # (bt, ty, dec_h)
    ctx = ctx_ref[...].astype(op)              # (bt, x_len, enc2)

    # linear_in (ctx @ W_in^T) is invariant across the y-tile axis: compute it
    # only on the first y step of each batch block and cache it in VMEM.
    @pl.when(pl.program_id(1) == 0)
    def _():
        ci = lax.dot_general(ctx, w_in_ref[...],
                             dimension_numbers=(((2,), (0,)), ((), ())),
                             preferred_element_type=f32)          # (bt, x, dec_h)
        ctx_in_ref[...] = ci.astype(op)

    ctx_in = ctx_in_ref[...]                   # (bt, x_len, dec_h) op dtype

    # scores: contract dec_h = last dim of BOTH operands -> no transpose.
    scores = lax.dot_general(dec_out, ctx_in,
                             dimension_numbers=(((2,), (2,)), ((0,), (0,))),
                             preferred_element_type=f32)          # (bt, ty, x) f32

    # masked_fill_(mask.bool(), -1e-06)  (value kept verbatim from PyTorch)
    scores = jnp.where(mask_ref[...] != 0, jnp.float32(-1e-06), scores)

    # softmax over x in f32, with an EXACT reciprocal (atten is an output).
    m = jnp.max(scores, axis=-1, keepdims=True)
    e = jnp.exp(scores - m)
    atten = e * (1.0 / jnp.sum(e, axis=-1, keepdims=True))        # (bt, ty, x) f32

    # weighted context: (bt, ty, x) x (bt, x, enc2) -> (bt, ty, enc2)
    ctx2 = lax.dot_general(atten.astype(op), ctx,
                           dimension_numbers=(((2,), (1,)), ((0,), (0,))),
                           preferred_element_type=f32)

    # linear_out over concat(ctx2, dec_out) == split matmul (no in-kernel concat)
    pre = (lax.dot_general(ctx2.astype(op), w_out_ctx_ref[...],
                           dimension_numbers=(((2,), (0,)), ((), ())),
                           preferred_element_type=f32)
           + lax.dot_general(dec_out, w_out_dec_ref[...],
                             dimension_numbers=(((2,), (0,)), ((), ())),
                             preferred_element_type=f32)
           + b_out_ref[...])                                      # (bt, ty, dec_h)
    res = jnp.tanh(pre)

    # Lane-dense stores: flattened last dim is ty*feat (multiple of 128 when
    # the y axis is tiled, else the full padded dim) -> unmasked vst.
    res_ref[...] = res.reshape(bt, ty * dec_h).astype(res_ref.dtype)
    attn_ref[...] = atten.reshape(bt, ty * x_len).astype(attn_ref.dtype)


# ----------------------------------------------------------------------------
# Tiling / VMEM heuristics
# ----------------------------------------------------------------------------
def _vmem_budget_bytes():
    # Generation-aware cap: ~55% of physical VMEM (v5e/v6e: 128 MiB -> ~70 MiB,
    # v7x: 64 MiB -> ~35 MiB). Conservative 64 MiB fallback if the query fails.
    try:
        cap = int(pltpu.get_tpu_info().vmem_capacity_bytes)
    except Exception:  # hardware query only; kernel config never silently changes
        cap = 64 * 1024 * 1024
    return int(0.55 * cap)


def _step_bytes(bt, ty, x_len, enc2, dec_h, op, out_dtype):
    """Rough per-grid-step VMEM estimate (double-buffered blocks + temps)."""
    opb = jnp.dtype(op).itemsize
    outb = jnp.dtype(out_dtype).itemsize
    inputs = 2 * (_nbytes((bt, ty, dec_h), jnp.float32)
                  + _nbytes((bt, x_len, enc2), jnp.float32)
                  + _nbytes((bt, ty, x_len), jnp.float32))
    outputs = 2 * (bt * ty * dec_h + bt * ty * x_len) * outb
    weights = 2 * ((2 * enc2 * dec_h + dec_h * dec_h) * opb + dec_h * 4)
    scratch = bt * x_len * dec_h * opb
    temps = (6 * bt * ty * x_len * 4                       # scores/exp/atten
             + 2 * bt * x_len * max(enc2, dec_h) * (4 + opb)  # ctx cast + ctx_in
             + 4 * bt * ty * dec_h * 4)                    # pre / res
    return inputs + outputs + weights + scratch + temps


def _choose_tiling(B, y_len, x_len, enc2, dec_h, op, out_dtype,
                   block_batch, block_y, budget):
    def lcm(a, b):
        return a * b // math.gcd(a, b)

    # Alignment for the lane-dense flattened output blocks when y is tiled.
    ty_align = lcm(8, lcm(128 // math.gcd(dec_h, 128),
                          128 // math.gcd(x_len, 128)))

    # ty: prefer the whole y extent (fat per-batch MXU M dim); tile only very
    # long sequences, aligned so ty*dec_h and ty*x_len stay multiples of 128.
    if block_y is not None:
        ty = int(block_y)
        if ty < y_len:
            ty = _round_up(ty, ty_align)
    elif y_len <= max(512, ty_align):
        ty = y_len
    else:
        ty = _round_up(256, ty_align)

    # bt: fat blocks, but keep nb >= 2 whenever the padded batch allows it so
    # both v7x TensorCores get work (v5e/v6e have 1 TC and are unaffected).
    B8 = max(8, _round_up(B, 8))
    if block_batch is not None:
        bt = max(8, _round_up(int(block_batch), 8))
    else:
        bt = min(128, B8)
        if B8 >= 16:
            bt = min(bt, max(8, (B8 // 2) // 8 * 8))

    # Fit the VMEM budget: shrink bt first (the ctx block (bt, x_len, enc2)
    # dominates VMEM and is independent of ty), then ty.
    while bt > 8 and _step_bytes(bt, ty, x_len, enc2, dec_h, op, out_dtype) > budget:
        bt -= 8
    while (ty > ty_align and
           _step_bytes(bt, ty, x_len, enc2, dec_h, op, out_dtype) > budget):
        ty = max(ty_align, (ty // 2) // ty_align * ty_align)
    return bt, ty


# ----------------------------------------------------------------------------
# pallas_call builder + wrapper
# ----------------------------------------------------------------------------
def _make_call(*, B_pad, y_pad, x_len, enc2, dec_h, bt, ty, op, out_dtype,
               vmem_limit):
    nb, ny = B_pad // bt, y_pad // ty

    in_specs = [
        pl.BlockSpec((bt, ty, dec_h), lambda b, t: (b, t, 0)),    # decoder out f32
        pl.BlockSpec((bt, x_len, enc2), lambda b, t: (b, 0, 0)),  # context f32
        pl.BlockSpec((bt, ty, x_len), lambda b, t: (b, t, 0)),    # mask f32
        pl.BlockSpec((enc2, dec_h), lambda b, t: (0, 0)),         # W_in^T
        pl.BlockSpec((enc2, dec_h), lambda b, t: (0, 0)),         # W_out (ctx part)
        pl.BlockSpec((dec_h, dec_h), lambda b, t: (0, 0)),        # W_out (dec part)
        pl.BlockSpec((1, dec_h), lambda b, t: (0, 0)),            # bias
    ]
    out_shape = (jax.ShapeDtypeStruct((B_pad, y_pad * dec_h), out_dtype),
                 jax.ShapeDtypeStruct((B_pad, y_pad * x_len), out_dtype))
    out_specs = [pl.BlockSpec((bt, ty * dec_h), lambda b, t: (b, t)),
                 pl.BlockSpec((bt, ty * x_len), lambda b, t: (b, t))]

    return pl.pallas_call(
        functools.partial(_attention_kernel, op_dtype=op),
        out_shape=out_shape,
        grid_spec=pltpu.PrefetchScalarGridSpec(
            num_scalar_prefetch=0,
            grid=(nb, ny),
            in_specs=in_specs,
            out_specs=out_specs,
            scratch_shapes=[pltpu.VMEM((bt, x_len, dec_h), op)],  # ctx_in cache
        ),
        compiler_params=pltpu.CompilerParams(
            # b: independent batch blocks (megacore-parallel on v7x);
            # t: carries the ctx_in VMEM cache -> must stay in order.
            dimension_semantics=("parallel", "arbitrary"),
            vmem_limit_bytes=vmem_limit,
        ),
    )


def attention_forward(output, context, masks, w_in, w_out, b_out, *,
                      block_batch=None, block_y=None,
                      matmul_dtype=jnp.bfloat16, out_dtype=jnp.float32):
    """output: (B, y_len, dec_h), context: (B, x_len, 2*enc_h),
    masks: (B, y_len, x_len) (nonzero == masked),
    w_in: (dec_h, 2*enc_h) [torch layout], w_out: (dec_h, 2*enc_h + dec_h),
    b_out: (dec_h,). Returns (res (B,y,dec_h), attn (B,y,x_len)) in out_dtype."""
    B, y_len, dec_h = output.shape
    _, x_len, enc2 = context.shape
    op = matmul_dtype

    budget = _vmem_budget_bytes()
    bt, ty = _choose_tiling(B, y_len, x_len, enc2, dec_h, op, out_dtype,
                            block_batch, block_y, budget)
    B_pad = _round_up(B, bt)
    y_pad = _round_up(y_len, ty)

    # Weights are tiny: transpose / split / cast once on the host side.
    w_in_t = jnp.asarray(w_in, jnp.float32).T.astype(op)           # (enc2, dec_h)
    w_out_t = jnp.asarray(w_out, jnp.float32).T                    # (enc2+dec_h, dec_h)
    w_out_ctx = w_out_t[:enc2, :].astype(op)                       # (enc2, dec_h)
    w_out_dec = w_out_t[enc2:, :].astype(op)                       # (dec_h, dec_h)
    b_row = jnp.asarray(b_out, jnp.float32).reshape(1, dec_h)

    # Activations / mask stay f32; the matmul-dtype cast happens in the kernel
    # (no extra wrapper-side HBM round trip).
    dec_p = jnp.asarray(output, jnp.float32)
    ctx_p = jnp.asarray(context, jnp.float32)
    mask_p = jnp.asarray(masks, jnp.float32)

    pad_b, pad_y = B_pad - B, y_pad - y_len
    if pad_b or pad_y:
        dec_p = jnp.pad(dec_p, ((0, pad_b), (0, pad_y), (0, 0)))
        ctx_p = jnp.pad(ctx_p, ((0, pad_b), (0, 0), (0, 0)))
        mask_p = jnp.pad(mask_p, ((0, pad_b), (0, pad_y), (0, 0)))
        # Padded rows are sliced off below; x_len itself is never padded, so the
        # verbatim -1e-06 fill never has to act as a "real" mask for padding.

    call = _make_call(B_pad=B_pad, y_pad=y_pad, x_len=x_len, enc2=enc2,
                      dec_h=dec_h, bt=bt, ty=ty, op=op, out_dtype=out_dtype,
                      vmem_limit=int(budget))
    res_flat, attn_flat = call(dec_p, ctx_p, mask_p, w_in_t, w_out_ctx,
                               w_out_dec, b_row)

    res = res_flat.reshape(B_pad, y_pad, dec_h)[:B, :y_len]    # free reshape
    attn = attn_flat.reshape(B_pad, y_pad, x_len)[:B, :y_len]
    return res, attn


# ----------------------------------------------------------------------------
# Pure-JAX reference (mirrors the PyTorch forward; same matmul precision policy)
# ----------------------------------------------------------------------------
def attention_reference(output, context, masks, w_in, w_out, b_out,
                        matmul_dtype=jnp.float32):
    cd = matmul_dtype
    f32 = jnp.float32
    out_c = output.astype(cd)
    ctx_c = context.astype(cd)
    ctx_in = jnp.einsum('bxe,de->bxd', ctx_c, w_in.astype(cd),
                        preferred_element_type=f32)
    atten = jnp.einsum('byd,bxd->byx', out_c, ctx_in.astype(cd),
                       preferred_element_type=f32)
    atten = jnp.where(masks != 0, jnp.float32(-1e-06), atten)
    atten = jax.nn.softmax(atten, axis=-1)
    ctx2 = jnp.einsum('byx,bxe->bye', atten.astype(cd), ctx_c,
                      preferred_element_type=f32)
    cat = jnp.concatenate([ctx2, output.astype(f32)], axis=-1)
    res = jnp.tanh(jnp.einsum('byf,df->byd', cat.astype(cd), w_out.astype(cd),
                              preferred_element_type=f32) + b_out)
    return res, atten


if __name__ == "__main__":
    key = jax.random.PRNGKey(0)
    B, y_len, x_len = 16, 16, 24
    enc_hidden, dec_hidden = 16, 32
    enc2 = 2 * enc_hidden

    k1, k2, k3, k4, k5, k6 = jax.random.split(key, 6)
    # deterministic parameter init (nn.Linear-style uniform bounds)
    w_in = jax.random.uniform(k1, (dec_hidden, enc2), jnp.float32,
                              -1.0 / jnp.sqrt(enc2), 1.0 / jnp.sqrt(enc2))
    w_out = jax.random.uniform(k2, (dec_hidden, enc2 + dec_hidden), jnp.float32,
                               -1.0 / jnp.sqrt(enc2 + dec_hidden),
                               1.0 / jnp.sqrt(enc2 + dec_hidden))
    b_out = jax.random.uniform(k3, (dec_hidden,), jnp.float32,
                               -1.0 / jnp.sqrt(enc2 + dec_hidden),
                               1.0 / jnp.sqrt(enc2 + dec_hidden))

    output = jax.random.normal(k4, (B, y_len, dec_hidden), jnp.float32)
    context = jax.random.normal(k5, (B, x_len, enc2), jnp.float32)
    masks = (jax.random.uniform(k6, (B, y_len, x_len)) < 0.3).astype(jnp.float32)

    res, attn = attention_forward(output, context, masks, w_in, w_out, b_out,
                                  matmul_dtype=jnp.bfloat16)
    res = jax.block_until_ready(res)
    attn = jax.block_until_ready(attn)
    assert res.shape == (B, y_len, dec_hidden)
    assert attn.shape == (B, y_len, x_len)

    # Compare against a reference with the same bf16-operand / f32-accumulate
    # policy (softmax is exact in both).
    res_ref, attn_ref = attention_reference(output, context, masks, w_in, w_out,
                                            b_out, matmul_dtype=jnp.bfloat16)
    assert jnp.allclose(res, res_ref, atol=2e-2, rtol=2e-2), "output mismatch"
    assert jnp.allclose(attn, attn_ref, atol=2e-2, rtol=2e-2), "attention mismatch"
    # attention rows must sum to 1 (exact softmax reciprocal in-kernel)
    assert jnp.allclose(attn.sum(-1), 1.0, atol=1e-5), "softmax not normalized"

    print("KERNEL_OK")
</pallas_src>

<mosaic_0001>
module attributes {stable_mosaic.version = 11 : i64} {
  func.func @_attention_kernel(%arg0: i32, %arg1: i32, %arg2: memref<8x16x32xf32, #tpu.memory_space<vmem>>, %arg3: memref<8x24x32xf32, #tpu.memory_space<vmem>>, %arg4: memref<8x16x24xf32, #tpu.memory_space<vmem>>, %arg5: memref<32x32xbf16, #tpu.memory_space<vmem>>, %arg6: memref<32x32xbf16, #tpu.memory_space<vmem>>, %arg7: memref<32x32xbf16, #tpu.memory_space<vmem>>, %arg8: memref<1x32xf32, #tpu.memory_space<vmem>>, %arg9: memref<8x512xf32, #tpu.memory_space<vmem>>, %arg10: memref<8x384xf32, #tpu.memory_space<vmem>>, %arg11: memref<8x24x32xbf16, #tpu.memory_space<vmem>>) attributes {dimension_semantics = [#tpu.dimension_semantics<parallel>, #tpu.dimension_semantics<arbitrary>], iteration_bounds = array<i64: 2, 1>, scalar_prefetch = 0 : i64, scratch_operands = 1 : i64, tpu.core_type = #tpu.core_type<tc>, window_params = [{transform_indices = @transform_0, window_bounds = array<i64: 8, 16, 32>}, {transform_indices = @transform_1, window_bounds = array<i64: 8, 24, 32>}, {transform_indices = @transform_2, window_bounds = array<i64: 8, 16, 24>}, {pipeline_mode = #tpu.pipeline_mode<synchronous>, transform_indices = @transform_3, window_bounds = array<i64: 32, 32>}, {pipeline_mode = #tpu.pipeline_mode<synchronous>, transform_indices = @transform_4, window_bounds = array<i64: 32, 32>}, {pipeline_mode = #tpu.pipeline_mode<synchronous>, transform_indices = @transform_5, window_bounds = array<i64: 32, 32>}, {pipeline_mode = #tpu.pipeline_mode<synchronous>, transform_indices = @transform_6, window_bounds = array<i64: 1, 32>}, {transform_indices = @transform_7, window_bounds = array<i64: 8, 512>}, {transform_indices = @transform_8, window_bounds = array<i64: 8, 384>}]} {
    %c0 = arith.constant 0 : index
    %c0_0 = arith.constant 0 : index
    %c0_1 = arith.constant 0 : index
    %0 = vector.load %arg2[%c0, %c0_0, %c0_1] : memref<8x16x32xf32, #tpu.memory_space<vmem>>, vector<8x16x32xf32>
    %1 = arith.truncf %0 : vector<8x16x32xf32> to vector<8x16x32xbf16>
    %c0_2 = arith.constant 0 : index
    %c0_3 = arith.constant 0 : index
    %c0_4 = arith.constant 0 : index
    %2 = vector.load %arg3[%c0_2, %c0_3, %c0_4] : memref<8x24x32xf32, #tpu.memory_space<vmem>>, vector<8x24x32xf32>
    %3 = arith.truncf %2 : vector<8x24x32xf32> to vector<8x24x32xbf16>
    %c0_i32 = arith.constant 0 : i32
    %4 = arith.cmpi eq, %arg1, %c0_i32 : i32
    %5 = arith.extui %4 : i1 to i32
    %c0_i32_5 = arith.constant 0 : i32
    %6 = arith.cmpi ne, %5, %c0_i32_5 : i32
    scf.if %6 {
      %c0_30 = arith.constant 0 : index
      %c0_31 = arith.constant 0 : index
      %42 = vector.load %arg5[%c0_30, %c0_31] : memref<32x32xbf16, #tpu.memory_space<vmem>>, vector<32x32xbf16>
      %cst_32 = arith.constant dense<0.000000e+00> : vector<8x24x32xf32>
      %43 = tpu.matmul %3, %42, %cst_32 {dimension_numbers = #tpu.dot_dimension_numbers<[2], [0], [0, 1], [1], [0, 0, 0, 1, 1, 1], [], []>} : vector<8x24x32xbf16>, vector<32x32xbf16>, vector<8x24x32xf32> -> vector<8x24x32xf32>
      %44 = arith.truncf %43 : vector<8x24x32xf32> to vector<8x24x32xbf16>
      %c0_33 = arith.constant 0 : index
      %c0_34 = arith.constant 0 : index
      %c0_35 = arith.constant 0 : index
      %45 = vector.load %arg11[%c0_33, %c0_34, %c0_35] : memref<8x24x32xbf16, #tpu.memory_space<vmem>>, vector<8x24x32xbf16>
      tpu.vector_store %arg11[%c0_33, %c0_34, %c0_35], %44 {strides = array<i32>} : memref<8x24x32xbf16, #tpu.memory_space<vmem>>, vector<8x24x32xbf16>,
    } else {
    }
    %c0_6 = arith.constant 0 : index
    %c0_7 = arith.constant 0 : index
    %c0_8 = arith.constant 0 : index
    %7 = vector.load %arg11[%c0_6, %c0_7, %c0_8] : memref<8x24x32xbf16, #tpu.memory_space<vmem>>, vector<8x24x32xbf16>
    %cst = arith.constant dense<0.000000e+00> : vector<8x16x24xf32>
    %8 = tpu.matmul %1, %7, %cst {dimension_numbers = #tpu.dot_dimension_numbers<[2], [2], [1], [1], [0, 0, 0, 1, 1, 1], [0], [0]>} : vector<8x16x32xbf16>, vector<8x24x32xbf16>, vector<8x16x24xf32> -> vector<8x16x24xf32>
    %c0_9 = arith.constant 0 : index
    %c0_10 = arith.constant 0 : index
    %c0_11 = arith.constant 0 : index
    %9 = vector.load %arg4[%c0_9, %c0_10, %c0_11] : memref<8x16x24xf32, #tpu.memory_space<vmem>>, vector<8x16x24xf32>
    %cst_12 = arith.constant 0.000000e+00 : f32
    %10 = vector.broadcast %cst_12 : f32 to vector<8x16x24xf32>
    %11 = arith.cmpf one, %9, %10 : vector<8x16x24xf32>
    %cst_13 = arith.constant -9.99999997E-7 : f32
    %12 = vector.broadcast %cst_13 : f32 to vector<8x16x24xf32>
    %13 = arith.select %11, %12, %8 : vector<8x16x24xi1>, vector<8x16x24xf32>
    %cst_14 = arith.constant dense<0xFF800000> : vector<8x16xf32>
    %14 = vector.multi_reduction <maximumf>, %13, %cst_14 [2] : vector<8x16x24xf32> to vector<8x16xf32>
    %15 = vector.shape_cast %14 : vector<8x16xf32> to vector<8x16x1xf32>
    %16 = vector.broadcast %15 : vector<8x16x1xf32> to vector<8x16x24xf32>
    %17 = arith.subf %13, %16 : vector<8x16x24xf32>
    %18 = math.exp %17 : vector<8x16x24xf32>
    %cst_15 = arith.constant dense<0.000000e+00> : vector<8x16xf32>
    %19 = vector.multi_reduction <add>, %18, %cst_15 [2] : vector<8x16x24xf32> to vector<8x16xf32>
    %20 = vector.shape_cast %19 : vector<8x16xf32> to vector<8x16x1xf32>
    %cst_16 = arith.constant 1.000000e+00 : f32
    %21 = vector.broadcast %cst_16 : f32 to vector<8x16x1xf32>
    %22 = arith.divf %21, %20 : vector<8x16x1xf32>
    %23 = vector.broadcast %22 : vector<8x16x1xf32> to vector<8x16x24xf32>
    %24 = arith.mulf %18, %23 : vector<8x16x24xf32>
    %25 = arith.truncf %24 : vector<8x16x24xf32> to vector<8x16x24xbf16>
    %cst_17 = arith.constant dense<0.000000e+00> : vector<8x16x32xf32>
    %26 = tpu.matmul %25, %3, %cst_17 {dimension_numbers = #tpu.dot_dimension_numbers<[2], [1], [1], [2], [0, 0, 0, 1, 1, 2], [0], [0]>} : vector<8x16x24xbf16>, vector<8x24x32xbf16>, vector<8x16x32xf32> -> vector<8x16x32xf32>
    %27 = arith.truncf %26 : vector<8x16x32xf32> to vector<8x16x32xbf16>
    %c0_18 = arith.constant 0 : index
    %c0_19 = arith.constant 0 : index
    %28 = vector.load %arg6[%c0_18, %c0_19] : memref<32x32xbf16, #tpu.memory_space<vmem>>, vector<32x32xbf16>
    %cst_20 = arith.constant dense<0.000000e+00> : vector<8x16x32xf32>
    %29 = tpu.matmul %27, %28, %cst_20 {dimension_numbers = #tpu.dot_dimension_numbers<[2], [0], [0, 1], [1], [0, 0, 0, 1, 1, 1], [], []>} : vector<8x16x32xbf16>, vector<32x32xbf16>, vector<8x16x32xf32> -> vector<8x16x32xf32>
    %c0_21 = arith.constant 0 : index
    %c0_22 = arith.constant 0 : index
    %30 = vector.load %arg7[%c0_21, %c0_22] : memref<32x32xbf16, #tpu.memory_space<vmem>>, vector<32x32xbf16>
    %cst_23 = arith.constant dense<0.000000e+00> : vector<8x16x32xf32>
    %31 = tpu.matmul %1, %30, %cst_23 {dimension_numbers = #tpu.dot_dimension_numbers<[2], [0], [0, 1], [1], [0, 0, 0, 1, 1, 1], [], []>} : vector<8x16x32xbf16>, vector<32x32xbf16>, vector<8x16x32xf32> -> vector<8x16x32xf32>
    %32 = arith.addf %29, %31 : vector<8x16x32xf32>
    %c0_24 = arith.constant 0 : index
    %c0_25 = arith.constant 0 : index
    %33 = vector.load %arg8[%c0_24, %c0_25] : memref<1x32xf32, #tpu.memory_space<vmem>>, vector<1x32xf32>
    %34 = vector.shape_cast %33 : vector<1x32xf32> to vector<1x1x32xf32>
    %35 = vector.broadcast %34 : vector<1x1x32xf32> to vector<8x16x32xf32>
    %36 = arith.addf %32, %35 : vector<8x16x32xf32>
    %37 = math.tanh %36 : vector<8x16x32xf32>
    %38 = vector.shape_cast %37 : vector<8x16x32xf32> to vector<8x512xf32>
    %c0_26 = arith.constant 0 : index
    %c0_27 = arith.constant 0 : index
    %39 = vector.load %arg9[%c0_26, %c0_27] : memref<8x512xf32, #tpu.memory_space<vmem>>, vector<8x512xf32>
    tpu.vector_store %arg9[%c0_26, %c0_27], %38 {strides = array<i32>} : memref<8x512xf32, #tpu.memory_space<vmem>>, vector<8x512xf32>,
    %40 = vector.shape_cast %24 : vector<8x16x24xf32> to vector<8x384xf32>
    %c0_28 = arith.constant 0 : index
    %c0_29 = arith.constant 0 : index
    %41 = vector.load %arg10[%c0_28, %c0_29] : memref<8x384xf32, #tpu.memory_space<vmem>>, vector<8x384xf32>
    tpu.vector_store %arg10[%c0_28, %c0_29], %40 {strides = array<i32>} : memref<8x384xf32, #tpu.memory_space<vmem>>, vector<8x384xf32>,
    return
  }
  func.func @transform_0(%arg0: i32, %arg1: i32) -> (i32, i32, i32) {
    %c0_i32 = arith.constant 0 : i32
    %c0_i32_0 = arith.constant 0 : i32
    return %arg0, %arg1, %c0_i32 : i32, i32, i32
  }
  func.func @transform_1(%arg0: i32, %arg1: i32) -> (i32, i32, i32) {
    %c0_i32 = arith.constant 0 : i32
    %c0_i32_0 = arith.constant 0 : i32
    %c0_i32_1 = arith.constant 0 : i32
    return %arg0, %c0_i32, %c0_i32_0 : i32, i32, i32
  }
  func.func @transform_2(%arg0: i32, %arg1: i32) -> (i32, i32, i32) {
    %c0_i32 = arith.constant 0 : i32
    %c0_i32_0 = arith.constant 0 : i32
    return %arg0, %arg1, %c0_i32 : i32, i32, i32
  }
  func.func @transform_3(%arg0: i32, %arg1: i32) -> (i32, i32) {
    %c0_i32 = arith.constant 0 : i32
    %c0_i32_0 = arith.constant 0 : i32
    %c0_i32_1 = arith.constant 0 : i32
    return %c0_i32, %c0_i32_0 : i32, i32
  }
  func.func @transform_4(%arg0: i32, %arg1: i32) -> (i32, i32) {
    %c0_i32 = arith.constant 0 : i32
    %c0_i32_0 = arith.constant 0 : i32
    %c0_i32_1 = arith.constant 0 : i32
    return %c0_i32, %c0_i32_0 : i32, i32
  }
  func.func @transform_5(%arg0: i32, %arg1: i32) -> (i32, i32) {
    %c0_i32 = arith.constant 0 : i32
    %c0_i32_0 = arith.constant 0 : i32
    %c0_i32_1 = arith.constant 0 : i32
    return %c0_i32, %c0_i32_0 : i32, i32
  }
  func.func @transform_6(%arg0: i32, %arg1: i32) -> (i32, i32) {
    %c0_i32 = arith.constant 0 : i32
    %c0_i32_0 = arith.constant 0 : i32
    %c0_i32_1 = arith.constant 0 : i32
    return %c0_i32, %c0_i32_0 : i32, i32
  }
  func.func @transform_7(%arg0: i32, %arg1: i32) -> (i32, i32) {
    %c0_i32 = arith.constant 0 : i32
    return %arg0, %arg1 : i32, i32
  }
  func.func @transform_8(%arg0: i32, %arg1: i32) -> (i32, i32) {
    %c0_i32 = arith.constant 0 : i32
    return %arg0, %arg1 : i32, i32
  }
}

</mosaic_0001>

<llo_original>
// kernel: tpu_custom_call.1
$region0: #{tpu_custom_call.1}
  #allocation0 [shape = 'u32[]', space=smem, size = 0x4, offset = 0x4, fixed_abs, tag = 'smem constant byte address 0x4 - core index']
  #allocation1 [shape = 'u32[144,128]{1,0:T(1,128)}', space=vmem, size = 0x12000, scoped, tag = 'internal scratch']
  #allocation2 [shape = 'bf16[8,24,32]{2,1,0:T(8,128)(2,1)}', space=vmem, size = 0xc000, scoped, tag = 'scratch operand']
  %s0 = inlined_call_operand.hbm [shape: f32[16,16,32], index: 0, kind: input, shape index: {}]
  %s1 = inlined_call_operand.hbm [shape: f32[16,24,32], index: 1, kind: input, shape index: {}]
  %s2 = inlined_call_operand.hbm [shape: f32[16,16,24], index: 2, kind: input, shape index: {}]
  %s3 = inlined_call_operand.hbm [shape: bf16[32,32], index: 3, kind: input, shape index: {}]
  %s4 = inlined_call_operand.hbm [shape: bf16[32,32], index: 4, kind: input, shape index: {}]
  %s5 = inlined_call_operand.vmem [shape: bf16[32,32], index: 5, kind: input, shape index: {}]
  %s6 = inlined_call_operand.vmem [shape: f32[1,32], index: 6, kind: input, shape index: {}]
  %s7 = inlined_call_operand.hbm [shape: f32[16,512], index: 7, kind: output, shape index: {0}]
  %s8 = inlined_call_operand.hbm [shape: f32[16,384], index: 8, kind: output, shape index: {1}]
  %9 = xla_tuple %s7, %s8
  %s10 = sld [smem:[#allocation0]]
  $region93: #{tpu_custom_call.1} parent=0
    _
  %s12 = ssub.s32 1, %s10
  %s13 = scalar_select 0, %s12, %s10
  $region1: #{tpu_custom_call.1} parent=0
    #allocation3 [shape = 'u8[131072]{0}', space=vmem, size = 0x20000, scoped, tag = 'input window, operand 0']
    #allocation4 [shape = 's32[2]{0}', space=sflag, size = 0x8, scoped, tag = 'scoped memory for tpu_custom_call.1']
    #allocation5 [shape = 's32[2]{0}', space=sflag, size = 0x8, scoped, tag = 'scoped memory for tpu_custom_call.1']
    #allocation6 [shape = 'u8[196608]{0}', space=vmem, size = 0x30000, scoped, tag = 'input window, operand 1']
    #allocation7 [shape = 's32[2]{0}', space=sflag, size = 0x8, scoped, tag = 'scoped memory for tpu_custom_call.1']
    #allocation8 [shape = 'u8[131072]{0}', space=vmem, size = 0x20000, scoped, tag = 'input window, operand 2']
    #allocation9 [shape = 'u8[8192]{0}', space=vmem, size = 0x2000, scoped, tag = 'input window, operand 3, single buffered']
    #allocation10 [shape = 's32[1]{0}', space=sflag, size = 0x4, scoped, tag = 'scoped memory for tpu_custom_call.1']
    #allocation11 [shape = 'u8[8192]{0}', space=vmem, size = 0x2000, scoped, tag = 'input window, operand 4, single buffered']
    #allocation12 [shape = 'u8[32768]{0}', space=vmem, size = 0x8000, scoped, tag = 'output window, operand 0']
    #allocation13 [shape = 'u8[24576]{0}', space=vmem, size = 0x6000, scoped, tag = 'output window, operand 1']
    #allocation14 [shape = 's32[2]{0}', space=sflag, size = 0x8, scoped, tag = 'scoped memory for tpu_custom_call.1']
    %14 = vsyncpa [#allocation4], 0
    %s15 = scalar_lea.sflag [#allocation4], 1
    %16 = vsyncpa %s15, 0
    %17 = vsyncpa [#allocation7], 0
    %s18 = scalar_lea.sflag [#allocation7], 1
    %19 = vsyncpa %s18, 0
    %20 = vsyncpa [#allocation10], 0
    %21 = vsyncpa [#allocation5], 0
    %s22 = scalar_lea.sflag [#allocation5], 1
    %23 = vsyncpa %s22, 0
    %24 = vsyncpa [#allocation14], 0
    %s25 = scalar_lea.sflag [#allocation14], 1
    %26 = vsyncpa %s25, 0
    loop: start=0, step=1, limit=4
    $region2: #{tpu_custom_call.1} parent=1 // loop_pre_header
      _
    $region3: #{tpu_custom_call.1} parent=1 // loop_header
      %s28 = sphi 0, %s32
      %p29 = scmp.ge.s32.totalorder %s28, 4
      %s35 = sphi 0, %s47
      %s36 = sphi 0, %s43
      %s37 = sphi 0, %s35
      %s38 = sphi 0, %s36
      %s39 = sphi 0, %s37
      %s40 = sphi 0, %s38
      %s52 = sphi 0, %s54
      %s55 = sphi 0, %s52
      %s56 = sphi 0, %s55
      %s72 = sphi 0, %s56
      %s78 = sphi 0, %s80
      %s81 = sphi 0, %s78
      %s82 = sphi 0, %s81
      %s98 = sphi 0, %s82
      %s106 = sphi 0, %s108
      %s109 = sphi 0, %s106
      %s110 = sphi 0, %s109
      %s126 = sphi 0, %s110
      %s130 = sphi 0, %s130
      %s132 = sphi 0, %s130
      %s133 = sphi 0, %s132
      %s147 = sphi 0, %s133
      %s151 = sphi 0, %s151
      %s153 = sphi 0, %s151
      %s154 = sphi 0, %s153
      %s168 = sphi 0, %s154
      %s172 = sphi 0, %s172
      %s174 = sphi 0, %s172
      %s175 = sphi 0, %s174
      %s189 = sphi 0, %s175
      %s193 = sphi 0, %s193
      %s195 = sphi 0, %s193
      %s196 = sphi 0, %s195
      %s210 = sphi 0, %s196
      %s218 = sphi 0, %s220
      %s221 = sphi 0, %s218
      %s222 = sphi 0, %s221
      %s238 = sphi 0, %s222
      %s246 = sphi 0, %s248
      %s249 = sphi 0, %s246
      %s250 = sphi 0, %s249
      %s266 = sphi 0, %s250
    $region4: #{tpu_custom_call.1} parent=1 // loop_header_branch
      %31 = sbr.rel (%p29) target = $region8
    $region5: #{tpu_custom_call.1} parent=1 // loop_body
      %s33 = ssub.s32 %s28, 1
      %s34 = ssub.s32 %s28, 2
      %s41 = sadd.s32 1, %s36
      %p42 = scmp.ge.s32.totalorder %s41, 1
      %s43 = scalar_select %p42, 0, %s41
      %s44 = sadd.s32 1, %s35
      %s45 = scalar_select %p42, %s44, %s35
      %p46 = scmp.ge.s32.totalorder %s45, 2
      %s47 = scalar_select %p46, 0, %s45
      %s48 = ssub.s32 %s35, %s47
      %s49 = ssub.s32 %s36, %s43
      %s50 = sor.u32 %s48, %s49
      %p51 = scmp.eq.s32.totalorder %s50, 0
      %s53 = sadd.s32 %s52, 1
      %s54 = scalar_select %p51, %s52, %s53
      %p57 = pneg %p51
      %p58 = scmp.eq.s32.totalorder %s28, 1
      %p59 = por %p57, %p58
      %p60 = scmp.ne.s32.totalorder %s52, %s55
      %p61 = scmp.eq.s32.totalorder %s28, 0
      %p62 = por %p60, %p61
      %p63 = scmp.ne.s32.totalorder %s52, %s55
      %p64 = scmp.eq.s32.totalorder %s33, 1
      %p65 = por %p63, %p64
      %p66 = scmp.ne.s32.totalorder %s55, %s56
      %p67 = scmp.eq.s32.totalorder %s33, 0
      %p68 = por %p66, %p67
      %p69 = scmp.ne.s32.totalorder %s55, %s56
      %p70 = scmp.eq.s32.totalorder %s34, 1
      %p71 = por %p69, %p70
      %p73 = scmp.ne.s32.totalorder %s56, %s72
      %p74 = scmp.eq.s32.totalorder %s34, 0
      %p75 = por %p73, %p74
      %s76 = ssub.s32 %s35, %s47
      %p77 = scmp.eq.s32.totalorder %s76, 0
      %s79 = sadd.s32 %s78, 1
      %s80 = scalar_select %p77, %s78, %s79
      %p83 = pneg %p77
      %p84 = scmp.eq.s32.totalorder %s28, 1
      %p85 = por %p83, %p84
      %p86 = scmp.ne.s32.totalorder %s78, %s81
      %p87 = scmp.eq.s32.totalorder %s28, 0
      %p88 = por %p86, %p87
      %p89 = scmp.ne.s32.totalorder %s78, %s81
      %p90 = scmp.eq.s32.totalorder %s33, 1
      %p91 = por %p89, %p90
      %p92 = scmp.ne.s32.totalorder %s81, %s82
      %p93 = scmp.eq.s32.totalorder %s33, 0
      %p94 = por %p92, %p93
      %p95 = scmp.ne.s32.totalorder %s81, %s82
      %p96 = scmp.eq.s32.totalorder %s34, 1
      %p97 = por %p95, %p96
      %p99 = scmp.ne.s32.totalorder %s82, %s98
      %p100 = scmp.eq.s32.totalorder %s34, 0
      %p101 = por %p99, %p100
      %s102 = ssub.s32 %s35, %s47
      %s103 = ssub.s32 %s36, %s43
      %s104 = sor.u32 %s102, %s103
      %p105 = scmp.eq.s32.totalorder %s104, 0
      %s107 = sadd.s32 %s106, 1
      %s108 = scalar_select %p105, %s106, %s107
      %p111 = pneg %p105
      %p112 = scmp.eq.s32.totalorder %s28, 1
      %p113 = por %p111, %p112
      %p114 = scmp.ne.s32.totalorder %s106, %s109
      %p115 = scmp.eq.s32.totalorder %s28, 0
      %p116 = por %p114, %p115
      %p117 = scmp.ne.s32.totalorder %s106, %s109
      %p118 = scmp.eq.s32.totalorder %s33, 1
      %p119 = por %p117, %p118
      %p120 = scmp.ne.s32.totalorder %s109, %s110
      %p121 = scmp.eq.s32.totalorder %s33, 0
      %p122 = por %p120, %p121
      %p123 = scmp.ne.s32.totalorder %s109, %s110
      %p124 = scmp.eq.s32.totalorder %s34, 1
      %p125 = por %p123, %p124
      %p127 = scmp.ne.s32.totalorder %s110, %s126
      %p128 = scmp.eq.s32.totalorder %s34, 0
      %p129 = por %p127, %p128
      %s131 = sadd.s32 %s130, 1
      %p134 = scmp.eq.s32.totalorder %s28, 1
      %p135 = scmp.ne.s32.totalorder %s130, %s132
      %p136 = scmp.eq.s32.totalorder %s28, 0
      %p137 = por %p135, %p136
      %p138 = scmp.ne.s32.totalorder %s130, %s132
      %p139 = scmp.eq.s32.totalorder %s33, 1
      %p140 = por %p138, %p139
      %p141 = scmp.ne.s32.totalorder %s132, %s133
      %p142 = scmp.eq.s32.totalorder %s33, 0
      %p143 = por %p141, %p142
      %p144 = scmp.ne.s32.totalorder %s132, %s133
      %p145 = scmp.eq.s32.totalorder %s34, 1
      %p146 = por %p144, %p145
      %p148 = scmp.ne.s32.totalorder %s133, %s147
      %p149 = scmp.eq.s32.totalorder %s34, 0
      %p150 = por %p148, %p149
      %s152 = sadd.s32 %s151, 1
      %p155 = scmp.eq.s32.totalorder %s28, 1
      %p156 = scmp.ne.s32.totalorder %s151, %s153
      %p157 = scmp.eq.s32.totalorder %s28, 0
      %p158 = por %p156, %p157
      %p159 = scmp.ne.s32.totalorder %s151, %s153
      %p160 = scmp.eq.s32.totalorder %s33, 1
      %p161 = por %p159, %p160
      %p162 = scmp.ne.s32.totalorder %s153, %s154
      %p163 = scmp.eq.s32.totalorder %s33, 0
      %p164 = por %p162, %p163
      %p165 = scmp.ne.s32.totalorder %s153, %s154
      %p166 = scmp.eq.s32.totalorder %s34, 1
      %p167 = por %p165, %p166
      %p169 = scmp.ne.s32.totalorder %s154, %s168
      %p170 = scmp.eq.s32.totalorder %s34, 0
      %p171 = por %p169, %p170
      %s173 = sadd.s32 %s172, 1
      %p176 = scmp.eq.s32.totalorder %s28, 1
      %p177 = scmp.ne.s32.totalorder %s172, %s174
      %p178 = scmp.eq.s32.totalorder %s28, 0
      %p179 = por %p177, %p178
      %p180 = scmp.ne.s32.totalorder %s172, %s174
      %p181 = scmp.eq.s32.totalorder %s33, 1
      %p182 = por %p180, %p181
      %p183 = scmp.ne.s32.totalorder %s174, %s175
      %p184 = scmp.eq.s32.totalorder %s33, 0
      %p185 = por %p183, %p184
      %p186 = scmp.ne.s32.totalorder %s174, %s175
      %p187 = scmp.eq.s32.totalorder %s34, 1
      %p188 = por %p186, %p187
      %p190 = scmp.ne.s32.totalorder %s175, %s189
      %p191 = scmp.eq.s32.totalorder %s34, 0
      %p192 = por %p190, %p191
      %s194 = sadd.s32 %s193, 1
      %p197 = scmp.eq.s32.totalorder %s28, 1
      %p198 = scmp.ne.s32.totalorder %s193, %s195
      %p199 = scmp.eq.s32.totalorder %s28, 0
      %p200 = por %p198, %p199
      %p201 = scmp.ne.s32.totalorder %s193, %s195
      %p202 = scmp.eq.s32.totalorder %s33, 1
      %p203 = por %p201, %p202
      %p204 = scmp.ne.s32.totalorder %s195, %s196
      %p205 = scmp.eq.s32.totalorder %s33, 0
      %p206 = por %p204, %p205
      %p207 = scmp.ne.s32.totalorder %s195, %s196
      %p208 = scmp.eq.s32.totalorder %s34, 1
      %p209 = por %p207, %p208
      %p211 = scmp.ne.s32.totalorder %s196, %s210
      %p212 = scmp.eq.s32.totalorder %s34, 0
      %p213 = por %p211, %p212
      %s214 = ssub.s32 %s35, %s47
      %s215 = ssub.s32 %s36, %s43
      %s216 = sor.u32 %s214, %s215
      %p217 = scmp.eq.s32.totalorder %s216, 0
      %s219 = sadd.s32 %s218, 1
      %s220 = scalar_select %p217, %s218, %s219
      %p223 = pneg %p217
      %p224 = scmp.eq.s32.totalorder %s28, 1
      %p225 = por %p223, %p224
      %p226 = scmp.ne.s32.totalorder %s218, %s221
      %p227 = scmp.eq.s32.totalorder %s28, 0
      %p228 = por %p226, %p227
      %p229 = scmp.ne.s32.totalorder %s218, %s221
      %p230 = scmp.eq.s32.totalorder %s33, 1
      %p231 = por %p229, %p230
      %p232 = scmp.ne.s32.totalorder %s221, %s222
      %p233 = scmp.eq.s32.totalorder %s33, 0
      %p234 = por %p232, %p233
      %p235 = scmp.ne.s32.totalorder %s221, %s222
      %p236 = scmp.eq.s32.totalorder %s34, 1
      %p237 = por %p235, %p236
      %p239 = scmp.ne.s32.totalorder %s222, %s238
      %p240 = scmp.eq.s32.totalorder %s34, 0
      %p241 = por %p239, %p240
      %s242 = ssub.s32 %s35, %s47
      %s243 = ssub.s32 %s36, %s43
      %s244 = sor.u32 %s242, %s243
      %p245 = scmp.eq.s32.totalorder %s244, 0
      %s247 = sadd.s32 %s246, 1
      %s248 = scalar_select %p245, %s246, %s247
      %p251 = pneg %p245
      %p252 = scmp.eq.s32.totalorder %s28, 1
      %p253 = por %p251, %p252
      %p254 = scmp.ne.s32.totalorder %s246, %s249
      %p255 = scmp.eq.s32.totalorder %s28, 0
      %p256 = por %p254, %p255
      %p257 = scmp.ne.s32.totalorder %s246, %s249
      %p258 = scmp.eq.s32.totalorder %s33, 1
      %p259 = por %p257, %p258
      %p260 = scmp.ne.s32.totalorder %s249, %s250
      %p261 = scmp.eq.s32.totalorder %s33, 0
      %p262 = por %p260, %p261
      %p263 = scmp.ne.s32.totalorder %s249, %s250
      %p264 = scmp.eq.s32.totalorder %s34, 1
      %p265 = por %p263, %p264
      %p267 = scmp.ne.s32.totalorder %s250, %s266
      %p268 = scmp.eq.s32.totalorder %s34, 0
      %p269 = por %p267, %p268
      %p270 = scmp.le.s32.totalorder 1, %s28
      %p271 = scmp.lt.s32.totalorder %s28, 3
      %p272 = pnand %p270, %p271
      %p273 = pneg %p272
      // Predicated region
      $region9: #{tpu_custom_call.1} parent=5 // pred_check
        _
      $region10: #{tpu_custom_call.1} parent=5 // pred_check_branch
        %275 = sbr.rel (%p272) target = $region12
      $region11: #{tpu_custom_call.1} parent=5 // pred_region
        %s276 = ssub.s32 %s28, 1
        // Predicated region
        $region13: #{tpu_custom_call.1} parent=11 // pred_check
          %p277 = pneg %p143
        $region14: #{tpu_custom_call.1} parent=11 // pred_check_branch
          %279 = sbr.rel (%p277) target = $region16
        $region15: #{tpu_custom_call.1} parent=11 // pred_region
          %s281 = ssub.s32 256, 256
          %282 = vsyncadd [#allocation10], %s281
          %s283 = sshll.u32 [#allocation9], 4
          %s284 = int_to_ptr.vmem [resolvable:$true] %s283
          %289 = dma.hbm_to_vmem [thread:$0]  %s3, 256, %s284, [#allocation10], 64, 64, 4
        $region16: #{tpu_custom_call.1} parent=11 // pred_fallthru
          _
        // Predicated region
        $region17: #{tpu_custom_call.1} parent=11 // pred_check
          %p290 = pneg %p164
        $region18: #{tpu_custom_call.1} parent=11 // pred_check_branch
          %292 = sbr.rel (%p290) target = $region20
        $region19: #{tpu_custom_call.1} parent=11 // pred_region
          %s294 = ssub.s32 256, 256
          %295 = vsyncadd [#allocation10], %s294
          %s296 = sshll.u32 [#allocation11], 4
          %s297 = int_to_ptr.vmem [resolvable:$true] %s296
          %302 = dma.hbm_to_vmem [thread:$0]  %s4, 256, %s297, [#allocation10], 64, 64, 4
        $region20: #{tpu_custom_call.1} parent=11 // pred_fallthru
          _
        // Predicated region
        $region21: #{tpu_custom_call.1} parent=11 // pred_check
          %p303 = pneg %p185
        $region22: #{tpu_custom_call.1} parent=11 // pred_check_branch
          %305 = sbr.rel (%p303) target = $region24
        $region23: #{tpu_custom_call.1} parent=11 // pred_region
          _
        $region24: #{tpu_custom_call.1} parent=11 // pred_fallthru
          _
        // Predicated region
        $region25: #{tpu_custom_call.1} parent=11 // pred_check
          %p306 = pneg %p206
        $region26: #{tpu_custom_call.1} parent=11 // pred_check_branch
          %308 = sbr.rel (%p306) target = $region28
        $region27: #{tpu_custom_call.1} parent=11 // pred_region
          _
        $region28: #{tpu_custom_call.1} parent=11 // pred_fallthru
          _
      $region12: #{tpu_custom_call.1} parent=5 // pred_fallthru
        _
      %p309 = scmp.lt.s32.totalorder %s28, 2
      // Predicated region
      $region29: #{tpu_custom_call.1} parent=5 // pred_check
        %p310 = pneg %p309
      $region30: #{tpu_custom_call.1} parent=5 // pred_check_branch
        %312 = sbr.rel (%p310) target = $region32
      $region31: #{tpu_custom_call.1} parent=5 // pred_region
        // Predicated region
        $region33: #{tpu_custom_call.1} parent=31 // pred_check
          %p313 = pneg %p62
        $region34: #{tpu_custom_call.1} parent=31 // pred_check_branch
          %315 = sbr.rel (%p313) target = $region36
        $region35: #{tpu_custom_call.1} parent=31 // pred_region
          %s316 = sand.u32 %s52, 1
          %s317 = scalar_lea.sflag [#allocation4], %s316
          %s318 = sand.u32 %s52, 1
          %s319 = smul.addr %s318, 128
          %s320 = scalar_lea.vmem [#allocation3], %s319
          %s321 = smul.u32 8, %s35
          %s322 = smul.u32 2, %s36
          %s324 = ssub.s32 2048, 2048
          %325 = vsyncadd %s317, %s324
          %s326 = smul.addr %s321, 2
          %s327 = sadd.s32 %s322, %s326
          %s328 = smul.addr %s327, 128
          %s329 = scalar_lea.hbm %s0, %s328
          %s330 = sshll.u32 %s320, 4
          %s331 = int_to_ptr.vmem [resolvable:$true] %s330
          %336 = dma.hbm_to_vmem [thread:$0]  %s329, 2048, %s331, %s317, 128, 128, 8
        $region36: #{tpu_custom_call.1} parent=31 // pred_fallthru
          _
        // Predicated region
        $region37: #{tpu_custom_call.1} parent=31 // pred_check
          %p337 = pneg %p88
        $region38: #{tpu_custom_call.1} parent=31 // pred_check_branch
          %339 = sbr.rel (%p337) target = $region40
        $region39: #{tpu_custom_call.1} parent=31 // pred_region
          %s340 = sand.u32 %s28, 1
          %s341 = scalar_lea.sflag [#allocation7], %s340
          %s342 = sand.u32 %s78, 1
          %s343 = smul.addr %s342, 192
          %s344 = scalar_lea.vmem [#allocation6], %s343
          %s345 = smul.u32 8, %s35
          %s347 = ssub.s32 3072, 3072
          %348 = vsyncadd %s341, %s347
          %s349 = smul.addr %s345, 3
          %s350 = smul.addr %s349, 128
          %s351 = scalar_lea.hbm %s1, %s350
          %s352 = sshll.u32 %s344, 4
          %s353 = int_to_ptr.vmem [resolvable:$true] %s352
          %358 = dma.hbm_to_vmem [thread:$0]  %s351, 3072, %s353, %s341, 128, 128, 8
        $region40: #{tpu_custom_call.1} parent=31 // pred_fallthru
          _
        // Predicated region
        $region41: #{tpu_custom_call.1} parent=31 // pred_check
          %p359 = pneg %p116
        $region42: #{tpu_custom_call.1} parent=31 // pred_check_branch
          %361 = sbr.rel (%p359) target = $region44
        $region43: #{tpu_custom_call.1} parent=31 // pred_region
          %s362 = sand.u32 %s28, 1
          %s363 = scalar_lea.sflag [#allocation7], %s362
          %s364 = sand.u32 %s106, 1
          %s365 = smul.addr %s364, 128
          %s366 = scalar_lea.vmem [#allocation8], %s365
          %s367 = smul.u32 8, %s35
          %s368 = smul.u32 2, %s36
          %s370 = ssub.s32 2048, 2048
          %371 = vsyncadd %s363, %s370
          %s372 = smul.addr %s367, 2
          %s373 = sadd.s32 %s368, %s372
          %s374 = smul.addr %s373, 128
          %s375 = scalar_lea.hbm %s2, %s374
          %s376 = sshll.u32 %s366, 4
          %s377 = int_to_ptr.vmem [resolvable:$true] %s376
          %382 = dma.hbm_to_vmem [thread:$0]  %s375, 2048, %s377, %s363, 128, 128, 8
        $region44: #{tpu_custom_call.1} parent=31 // pred_fallthru
          _
      $region32: #{tpu_custom_call.1} parent=5 // pred_fallthru
        _
      %p383 = scmp.le.s32.totalorder 1, %s28
      %p384 = scmp.lt.s32.totalorder %s28, 3
      %p385 = pnand %p383, %p384
      %p386 = pneg %p385
      // Predicated region
      $region45: #{tpu_custom_call.1} parent=5 // pred_check
        _
      $region46: #{tpu_custom_call.1} parent=5 // pred_check_branch
        %388 = sbr.rel (%p385) target = $region48
      $region47: #{tpu_custom_call.1} parent=5 // pred_region
        %s389 = ssub.s32 %s28, 1
        %s390 = sand.u32 %s55, 1
        %s391 = scalar_lea.sflag [#allocation4], %s390
        %s392 = sand.u32 %s55, 1
        %s393 = smul.addr %s392, 128
        %s394 = scalar_lea.vmem [#allocation3], %s393
        // Predicated region
        $region49: #{tpu_custom_call.1} parent=47 // pred_check
          %p395 = pneg %p68
        $region50: #{tpu_custom_call.1} parent=47 // pred_check_branch
          %397 = sbr.rel (%p395) target = $region52
        $region51: #{tpu_custom_call.1} parent=47 // pred_region
          %398 = dma.done %s391, 2048
        $region52: #{tpu_custom_call.1} parent=47 // pred_fallthru
          _
        %s399 = sand.u32 %s33, 1
        %s400 = scalar_lea.sflag [#allocation7], %s399
        %s401 = sand.u32 %s81, 1
        %s402 = smul.addr %s401, 192
        %s403 = scalar_lea.vmem [#allocation6], %s402
        // Predicated region
        $region53: #{tpu_custom_call.1} parent=47 // pred_check
          %p404 = pneg %p94
        $region54: #{tpu_custom_call.1} parent=47 // pred_check_branch
          %406 = sbr.rel (%p404) target = $region56
        $region55: #{tpu_custom_call.1} parent=47 // pred_region
          %407 = dma.done %s400, 3072
        $region56: #{tpu_custom_call.1} parent=47 // pred_fallthru
          _
        %s408 = sand.u32 %s33, 1
        %s409 = scalar_lea.sflag [#allocation7], %s408
        %s410 = sand.u32 %s109, 1
        %s411 = smul.addr %s410, 128
        %s412 = scalar_lea.vmem [#allocation8], %s411
        // Predicated region
        $region57: #{tpu_custom_call.1} parent=47 // pred_check
          %p413 = pneg %p122
        $region58: #{tpu_custom_call.1} parent=47 // pred_check_branch
          %415 = sbr.rel (%p413) target = $region60
        $region59: #{tpu_custom_call.1} parent=47 // pred_region
          %416 = dma.done %s409, 2048
        $region60: #{tpu_custom_call.1} parent=47 // pred_fallthru
          _
        // Predicated region
        $region61: #{tpu_custom_call.1} parent=47 // pred_check
          %p417 = pneg %p143
        $region62: #{tpu_custom_call.1} parent=47 // pred_check_branch
          %419 = sbr.rel (%p417) target = $region64
        $region63: #{tpu_custom_call.1} parent=47 // pred_region
          %420 = dma.done [#allocation10], 256
        $region64: #{tpu_custom_call.1} parent=47 // pred_fallthru
          _
        // Predicated region
        $region65: #{tpu_custom_call.1} parent=47 // pred_check
          %p421 = pneg %p164
        $region66: #{tpu_custom_call.1} parent=47 // pred_check_branch
          %423 = sbr.rel (%p421) target = $region68
        $region67: #{tpu_custom_call.1} parent=47 // pred_region
          %424 = dma.done [#allocation10], 256
        $region68: #{tpu_custom_call.1} parent=47 // pred_fallthru
          _
        %s425 = sand.u32 %s55, 1
        %s426 = scalar_lea.sflag [#allocation4], %s425
        %s427 = sand.u32 %s55, 1
        %s428 = smul.addr %s427, 128
        %s429 = scalar_lea.vmem [#allocation3], %s428
        %p430 = pneg %p68
        %p431 = pneg %p65
        %s432 = sand.u32 %s33, 1
        %s433 = scalar_lea.sflag [#allocation7], %s432
        %s434 = sand.u32 %s81, 1
        %s435 = smul.addr %s434, 192
        %s436 = scalar_lea.vmem [#allocation6], %s435
        %p437 = pneg %p94
        %p438 = pneg %p91
        %s439 = sand.u32 %s33, 1
        %s440 = scalar_lea.sflag [#allocation7], %s439
        %s441 = sand.u32 %s109, 1
        %s442 = smul.addr %s441, 128
        %s443 = scalar_lea.vmem [#allocation8], %s442
        %p444 = pneg %p122
        %p445 = pneg %p119
        %p446 = pneg %p143
        %p447 = pneg %p140
        %p448 = pneg %p164
        %p449 = pneg %p161
        %p450 = pneg %p185
        %p451 = pneg %p182
        %p452 = pneg %p206
        %p453 = pneg %p203
        %p454 = pneg %p234
        %p455 = pneg %p231
        %s456 = sand.u32 %s221, 1
        %s457 = scalar_lea.sflag [#allocation5], %s456
        %s458 = sand.u32 %s221, 1
        %s459 = smul.addr %s458, 32
        %s460 = scalar_lea.vmem [#allocation12], %s459
        %p461 = pneg %p262
        %p462 = pneg %p259
        %s463 = sand.u32 %s249, 1
        %s464 = scalar_lea.sflag [#allocation14], %s463
        %s465 = sand.u32 %s249, 1
        %s466 = smul.addr %s465, 24
        %s467 = scalar_lea.vmem [#allocation13], %s466
        %s468 = smul.u32 8, %s37
        %s469 = smul.u32 2, %s38
        %s470 = smul.u32 8, %s37
        %s471 = smul.u32 8, %s37
        %s472 = smul.u32 2, %s38
        %s473 = smul.u32 4, %s38
        %s474 = smul.u32 3, %s38
        %v476 = vld [vmem:[%s394] sm:$0xff]
        %v477 = vld [vmem:[%s394 + $0x8] sm:$0xff]
        %v478 = vld [vmem:[%s394 + $0x10] sm:$0xff]
        %v479 = vld [vmem:[%s394 + $0x18] sm:$0xff]
        %v480 = vld [vmem:[%s394 + $0x20] sm:$0xff]
        %v481 = vld [vmem:[%s394 + $0x28] sm:$0xff]
        %v482 = vld [vmem:[%s394 + $0x30] sm:$0xff]
        %v483 = vld [vmem:[%s394 + $0x38] sm:$0xff]
        %v484 = vld [vmem:[%s394 + $0x40] sm:$0xff]
        %v485 = vld [vmem:[%s394 + $0x48] sm:$0xff]
        %v486 = vld [vmem:[%s394 + $0x50] sm:$0xff]
        %v487 = vld [vmem:[%s394 + $0x58] sm:$0xff]
        %v488 = vld [vmem:[%s394 + $0x60] sm:$0xff]
        %v489 = vld [vmem:[%s394 + $0x68] sm:$0xff]
        %v490 = vld [vmem:[%s394 + $0x70] sm:$0xff]
        %v491 = vld [vmem:[%s394 + $0x78] sm:$0xff]
        %v492 = vpack.c.bf16 %v477, %v476
        %v493 = vpack.c.bf16 %v479, %v478
        %v494 = vpack.c.bf16 %v481, %v480
        %v495 = vpack.c.bf16 %v483, %v482
        %v496 = vpack.c.bf16 %v485, %v484
        %v497 = vpack.c.bf16 %v487, %v486
        %v498 = vpack.c.bf16 %v489, %v488
        %v499 = vpack.c.bf16 %v491, %v490
        %v500 = vld [vmem:[%s403] sm:$0xff]
        %v501 = vld [vmem:[%s403 + $0x8] sm:$0xff]
        %v502 = vld [vmem:[%s403 + $0x10] sm:$0xff]
        %v503 = vld [vmem:[%s403 + $0x18] sm:$0xff]
        %v504 = vld [vmem:[%s403 + $0x20] sm:$0xff]
        %v505 = vld [vmem:[%s403 + $0x28] sm:$0xff]
        %v506 = vld [vmem:[%s403 + $0x30] sm:$0xff]
        %v507 = vld [vmem:[%s403 + $0x38] sm:$0xff]
        %v508 = vld [vmem:[%s403 + $0x40] sm:$0xff]
        %v509 = vld [vmem:[%s403 + $0x48] sm:$0xff]
        %v510 = vld [vmem:[%s403 + $0x50] sm:$0xff]
        %v511 = vld [vmem:[%s403 + $0x58] sm:$0xff]
        %v512 = vld [vmem:[%s403 + $0x60] sm:$0xff]
        %v513 = vld [vmem:[%s403 + $0x68] sm:$0xff]
        %v514 = vld [vmem:[%s403 + $0x70] sm:$0xff]
        %v515 = vld [vmem:[%s403 + $0x78] sm:$0xff]
        %v516 = vld [vmem:[%s403 + $0x80] sm:$0xff]
        %v517 = vld [vmem:[%s403 + $0x88] sm:$0xff]
        %v518 = vld [vmem:[%s403 + $0x90] sm:$0xff]
        %v519 = vld [vmem:[%s403 + $0x98] sm:$0xff]
        %v520 = vld [vmem:[%s403 + $0xa0] sm:$0xff]
        %v521 = vld [vmem:[%s403 + $0xa8] sm:$0xff]
        %v522 = vld [vmem:[%s403 + $0xb0] sm:$0xff]
        %v523 = vld [vmem:[%s403 + $0xb8] sm:$0xff]
        %v524 = vpack.c.bf16 %v501, %v500
        %v525 = vpack.c.bf16 %v502, %v502
        %v526 = vpack.c.bf16 %v504, %v503
        %v527 = vpack.c.bf16 %v505, %v505
        %v528 = vpack.c.bf16 %v507, %v506
        %v529 = vpack.c.bf16 %v508, %v508
        %v530 = vpack.c.bf16 %v510, %v509
        %v531 = vpack.c.bf16 %v511, %v511
        %v532 = vpack.c.bf16 %v513, %v512
        %v533 = vpack.c.bf16 %v514, %v514
        %v534 = vpack.c.bf16 %v516, %v515
        %v535 = vpack.c.bf16 %v517, %v517
        %v536 = vpack.c.bf16 %v519, %v518
        %v537 = vpack.c.bf16 %v520, %v520
        %v538 = vpack.c.bf16 %v522, %v521
        %v539 = vpack.c.bf16 %v523, %v523
        %p540 = scmp.eq.s32.totalorder %s38, 0
        // Predicated region
        $region69: #{tpu_custom_call.1} parent=47 // pred_check
          %p541 = pneg %p540
        $region70: #{tpu_custom_call.1} parent=47 // pred_check_branch
          %543 = sbr.rel (%p541) target = $region72
        $region71: #{tpu_custom_call.1} parent=47 // pred_region
          %v544 = vld [vmem:[#allocation9] sm:$0xf]
          %v545 = vld [vmem:[#allocation9 + $0x4] sm:$0xf]
          %v546 = vld [vmem:[#allocation9 + $0x8] sm:$0xf]
          %v547 = vld [vmem:[#allocation9 + $0xc] sm:$0xf]
          %v564 = vunpack.c.l.b16 %v524
          %v565 = vunpack.c.h.b16 %v524
          %v566 = vunpack.c.l.b16 %v525
          %v567 = vunpack.c.l.b16 %v526
          %v568 = vunpack.c.h.b16 %v526
          %v569 = vunpack.c.l.b16 %v527
          %v570 = vunpack.c.l.b16 %v528
          %v571 = vunpack.c.h.b16 %v528
          %v572 = vunpack.c.l.b16 %v529
          %v573 = vunpack.c.l.b16 %v530
          %v574 = vunpack.c.h.b16 %v530
          %v575 = vunpack.c.l.b16 %v531
          %v576 = vunpack.c.l.b16 %v532
          %v577 = vunpack.c.h.b16 %v532
          %v578 = vunpack.c.l.b16 %v533
          %v579 = vunpack.c.l.b16 %v534
          %v580 = vunpack.c.h.b16 %v534
          %v581 = vunpack.c.l.b16 %v535
          %v582 = vunpack.c.l.b16 %v536
          %v583 = vunpack.c.h.b16 %v536
          %v584 = vunpack.c.l.b16 %v537
          %v585 = vunpack.c.l.b16 %v538
          %v586 = vunpack.c.h.b16 %v538
          %v587 = vunpack.c.l.b16 %v539
          %v588 = vpack.c.b16 %v565, %v564
          %v589 = vpack.c.b16 %v567, %v566
          %v590 = vpack.c.b16 %v569, %v568
          %v591 = vpack.c.b16 %v571, %v570
          %v592 = vpack.c.b16 %v573, %v572
          %v593 = vpack.c.b16 %v575, %v574
          %v594 = vpack.c.b16 %v577, %v576
          %v595 = vpack.c.b16 %v579, %v578
          %v596 = vpack.c.b16 %v581, %v580
          %v597 = vpack.c.b16 %v583, %v582
          %v598 = vpack.c.b16 %v585, %v584
          %v599 = vpack.c.b16 %v587, %v586
          %v604 = vunpack.c.l.b16 %v544
          %v605 = vunpack.c.l.b16 %v545
          %v606 = vunpack.c.l.b16 %v546
          %v607 = vunpack.c.l.b16 %v547
          %v608 = vpack.c.b16 %v605, %v604
          %v609 = vpack.c.b16 %v607, %v606
          %vm612 = vcmask 261120
          %v614 = vsel %vm612, %v588, 0
          %v617 = vsel %vm612, %v589, 0
          %v620 = vsel %vm612, %v590, 0
          %v623 = vsel %vm612, %v591, 0
          %v626 = vsel %vm612, %v592, 0
          %v629 = vsel %vm612, %v593, 0
          %v632 = vsel %vm612, %v594, 0
          %v635 = vsel %vm612, %v595, 0
          %v638 = vsel %vm612, %v596, 0
          %v641 = vsel %vm612, %v597, 0
          %v644 = vsel %vm612, %v598, 0
          %v647 = vsel %vm612, %v599, 0
          %649 = vmatprep.subr.bf16.mxu0 0
          %650 = vmatpush1.bf16.msra.mxu0 %v608
          %651 = vmatprep.subr.bf16.mxu0 0
          %652 = vmatpush1.bf16.msra.mxu0 %v609
          %653 = vmatprep.subr.bf16.mxu0 0
          %654 = vmatpush1.bf16.msra.mxu0 0
          %655 = vmatprep.subr.bf16.mxu0 0
          %656 = vmatpush1.bf16.msra.mxu0 0
          %657 = vmatprep.subr.bf16.mxu0 0
          %658 = vmatpush1.bf16.msra.mxu0 0
          %659 = vmatprep.subr.bf16.mxu0 0
          %660 = vmatpush1.bf16.msra.mxu0 0
          %661 = vmatprep.subr.bf16.mxu0 0
          %662 = vmatpush1.bf16.msra.mxu0 0
          %663 = vmatprep.subr.bf16.mxu0 0
          %664 = vmatpush1.bf16.msra.mxu0 0
          %665 = vmatprep.subr.bf16.mxu0 0
          %666 = vmatpush1.bf16.msra.mxu0 0
          %667 = vmatprep.subr.bf16.mxu0 0
          %668 = vmatpush1.bf16.msra.mxu0 0
          %669 = vmatprep.subr.bf16.mxu0 0
          %670 = vmatpush1.bf16.msra.mxu0 0
          %671 = vmatprep.subr.bf16.mxu0 0
          %672 = vmatpush1.bf16.msra.mxu0 0
          %673 = vmatprep.subr.bf16.mxu0 0
          %674 = vmatpush1.bf16.msra.mxu0 0
          %675 = vmatprep.subr.bf16.mxu0 0
          %676 = vmatpush1.bf16.msra.mxu0 0
          %677 = vmatprep.subr.bf16.mxu0 0
          %678 = vmatpush1.bf16.msra.mxu0 0
          %679 = vmatprep.subr.bf16.mxu0 0
          %680 = vmatpush1.bf16.msra.mxu0 0
          %681 = vmatprep.mubr.bf16.mxu0 0
          %682 = vmatmul.mubr.bf16.gmra.mrb[0].mxu0 %v614
          %v683 = vpop.f32.mrb[0].mxu0
          %v684 = vadd.f32 0.0, %v683
          %v685 = vpop.f32.mrb[0].mxu0
          %v686 = vpop.f32.mrb[0].mxu0
          %v687 = vadd.f32 0.0, %v686
          %v688 = vpop.f32.mrb[0].mxu0
          %689 = vmatprep.mubr.bf16.mxu0 0
          %690 = vmatmul.mubr.bf16.gmra.mrb[0].mxu0 %v617
          %v691 = vpop.f32.mrb[0].mxu0
          %v692 = vadd.f32 0.0, %v691
          %v693 = vpop.f32.mrb[0].mxu0
          %v694 = vpop.f32.mrb[0].mxu0
          %v695 = vadd.f32 0.0, %v694
          %v696 = vpop.f32.mrb[0].mxu0
          %697 = vmatprep.mubr.bf16.mxu0 0
          %698 = vmatmul.mubr.bf16.gmra.mrb[0].mxu0 %v620
          %v699 = vpop.f32.mrb[0].mxu0
          %v700 = vadd.f32 0.0, %v699
          %v701 = vpop.f32.mrb[0].mxu0
          %v702 = vpop.f32.mrb[0].mxu0
          %v703 = vadd.f32 0.0, %v702
          %v704 = vpop.f32.mrb[0].mxu0
          %705 = vmatprep.mubr.bf16.mxu0 0
          %706 = vmatmul.mubr.bf16.gmra.mrb[0].mxu0 %v623
          %v707 = vpop.f32.mrb[0].mxu0
          %v708 = vadd.f32 0.0, %v707
          %v709 = vpop.f32.mrb[0].mxu0
          %v710 = vpop.f32.mrb[0].mxu0
          %v711 = vadd.f32 0.0, %v710
          %v712 = vpop.f32.mrb[0].mxu0
          %713 = vmatprep.mubr.bf16.mxu0 0
          %714 = vmatmul.mubr.bf16.gmra.mrb[0].mxu0 %v626
          %v715 = vpop.f32.mrb[0].mxu0
          %v716 = vadd.f32 0.0, %v715
          %v717 = vpop.f32.mrb[0].mxu0
          %v718 = vpop.f32.mrb[0].mxu0
          %v719 = vadd.f32 0.0, %v718
          %v720 = vpop.f32.mrb[0].mxu0
          %721 = vmatprep.mubr.bf16.mxu0 0
          %722 = vmatmul.mubr.bf16.gmra.mrb[0].mxu0 %v629
          %v723 = vpop.f32.mrb[0].mxu0
          %v724 = vadd.f32 0.0, %v723
          %v725 = vpop.f32.mrb[0].mxu0
          %v726 = vpop.f32.mrb[0].mxu0
          %v727 = vadd.f32 0.0, %v726
          %v728 = vpop.f32.mrb[0].mxu0
          %729 = vmatprep.mubr.bf16.mxu0 0
          %730 = vmatmul.mubr.bf16.gmra.mrb[0].mxu0 %v632
          %v731 = vpop.f32.mrb[0].mxu0
          %v732 = vadd.f32 0.0, %v731
          %v733 = vpop.f32.mrb[0].mxu0
          %v734 = vpop.f32.mrb[0].mxu0
          %v735 = vadd.f32 0.0, %v734
          %v736 = vpop.f32.mrb[0].mxu0
          %737 = vmatprep.mubr.bf16.mxu0 0
          %738 = vmatmul.mubr.bf16.gmra.mrb[0].mxu0 %v635
          %v739 = vpop.f32.mrb[0].mxu0
          %v740 = vadd.f32 0.0, %v739
          %v741 = vpop.f32.mrb[0].mxu0
          %v742 = vpop.f32.mrb[0].mxu0
          %v743 = vadd.f32 0.0, %v742
          %v744 = vpop.f32.mrb[0].mxu0
          %745 = vmatprep.mubr.bf16.mxu0 0
          %746 = vmatmul.mubr.bf16.gmra.mrb[0].mxu0 %v638
          %v747 = vpop.f32.mrb[0].mxu0
          %v748 = vadd.f32 0.0, %v747
          %v749 = vpop.f32.mrb[0].mxu0
          %v750 = vpop.f32.mrb[0].mxu0
          %v751 = vadd.f32 0.0, %v750
          %v752 = vpop.f32.mrb[0].mxu0
          %753 = vmatprep.mubr.bf16.mxu0 0
          %754 = vmatmul.mubr.bf16.gmra.mrb[0].mxu0 %v641
          %v755 = vpop.f32.mrb[0].mxu0
          %v756 = vadd.f32 0.0, %v755
          %v757 = vpop.f32.mrb[0].mxu0
          %v758 = vpop.f32.mrb[0].mxu0
          %v759 = vadd.f32 0.0, %v758
          %v760 = vpop.f32.mrb[0].mxu0
          %761 = vmatprep.mubr.bf16.mxu0 0
          %762 = vmatmul.mubr.bf16.gmra.mrb[0].mxu0 %v644
          %v763 = vpop.f32.mrb[0].mxu0
          %v764 = vadd.f32 0.0, %v763
          %v765 = vpop.f32.mrb[0].mxu0
          %v766 = vpop.f32.mrb[0].mxu0
          %v767 = vadd.f32 0.0, %v766
          %v768 = vpop.f32.mrb[0].mxu0
          %769 = vmatprep.mubr.bf16.mxu0 0
          %770 = vmatmul.mubr.bf16.gmra.mrb[0].mxu0 %v647
          %v771 = vpop.f32.mrb[0].mxu0
          %v772 = vadd.f32 0.0, %v771
          %v773 = vpop.f32.mrb[0].mxu0
          %v774 = vpop.f32.mrb[0].mxu0
          %v775 = vadd.f32 0.0, %v774
          %v776 = vpop.f32.mrb[0].mxu0
          %777 = vdwg.mxu0
          %v778 = vpack.c.bf16 %v687, %v684
          %v779 = vpack.c.bf16 %v692, %v692
          %v780 = vpack.c.bf16 %v700, %v695
          %v781 = vpack.c.bf16 %v703, %v703
          %v782 = vpack.c.bf16 %v711, %v708
          %v783 = vpack.c.bf16 %v716, %v716
          %v784 = vpack.c.bf16 %v724, %v719
          %v785 = vpack.c.bf16 %v727, %v727
          %v786 = vpack.c.bf16 %v735, %v732
          %v787 = vpack.c.bf16 %v740, %v740
          %v788 = vpack.c.bf16 %v748, %v743
          %v789 = vpack.c.bf16 %v751, %v751
          %v790 = vpack.c.bf16 %v759, %v756
          %v791 = vpack.c.bf16 %v764, %v764
          %v792 = vpack.c.bf16 %v772, %v767
          %v793 = vpack.c.bf16 %v775, %v775
          %v810 = vunpack.c.l.b16 %v778
          %v811 = vunpack.c.h.b16 %v778
          %v812 = vunpack.c.l.b16 %v779
          %v813 = vunpack.c.l.b16 %v780
          %v814 = vunpack.c.h.b16 %v780
          %v815 = vunpack.c.l.b16 %v781
          %v816 = vunpack.c.l.b16 %v782
          %v817 = vunpack.c.h.b16 %v782
          %v818 = vunpack.c.l.b16 %v783
          %v819 = vunpack.c.l.b16 %v784
          %v820 = vunpack.c.h.b16 %v784
          %v821 = vunpack.c.l.b16 %v785
          %v822 = vunpack.c.l.b16 %v786
          %v823 = vunpack.c.h.b16 %v786
          %v824 = vunpack.c.l.b16 %v787
          %v825 = vunpack.c.l.b16 %v788
          %v826 = vunpack.c.h.b16 %v788
          %v827 = vunpack.c.l.b16 %v789
          %v828 = vunpack.c.l.b16 %v790
          %v829 = vunpack.c.h.b16 %v790
          %v830 = vunpack.c.l.b16 %v791
          %v831 = vunpack.c.l.b16 %v792
          %v832 = vunpack.c.h.b16 %v792
          %v833 = vunpack.c.l.b16 %v793
          %v834 = vpack.c.b16 %v810, %v810
          %v835 = vpack.c.b16 %v811, %v811
          %v836 = vpack.c.b16 %v812, %v812
          %v837 = vpack.c.b16 %v813, %v813
          %v838 = vpack.c.b16 %v814, %v814
          %v839 = vpack.c.b16 %v815, %v815
          %v840 = vpack.c.b16 %v816, %v816
          %v841 = vpack.c.b16 %v817, %v817
          %v842 = vpack.c.b16 %v818, %v818
          %v843 = vpack.c.b16 %v819, %v819
          %v844 = vpack.c.b16 %v820, %v820
          %v845 = vpack.c.b16 %v821, %v821
          %v846 = vpack.c.b16 %v822, %v822
          %v847 = vpack.c.b16 %v823, %v823
          %v848 = vpack.c.b16 %v824, %v824
          %v849 = vpack.c.b16 %v825, %v825
          %v850 = vpack.c.b16 %v826, %v826
          %v851 = vpack.c.b16 %v827, %v827
          %v852 = vpack.c.b16 %v828, %v828
          %v853 = vpack.c.b16 %v829, %v829
          %v854 = vpack.c.b16 %v830, %v830
          %v855 = vpack.c.b16 %v831, %v831
          %v856 = vpack.c.b16 %v832, %v832
          %v857 = vpack.c.b16 %v833, %v833
          %vm882 = vcmask 257024
          %883 = vst.msk [vmem:[#allocation2] sm:$0xf] %vm882, %v834
          %884 = vst.msk [vmem:[#allocation2 + $0x4] sm:$0xf] %vm882, %v835
          %885 = vst.msk [vmem:[#allocation2 + $0x8] sm:$0xf] %vm882, %v836
          %886 = vst.msk [vmem:[#allocation2 + $0xc] sm:$0xf] %vm882, %v837
          %887 = vst.msk [vmem:[#allocation2 + $0x10] sm:$0xf] %vm882, %v838
          %888 = vst.msk [vmem:[#allocation2 + $0x14] sm:$0xf] %vm882, %v839
          %889 = vst.msk [vmem:[#allocation2 + $0x18] sm:$0xf] %vm882, %v840
          %890 = vst.msk [vmem:[#allocation2 + $0x1c] sm:$0xf] %vm882, %v841
          %891 = vst.msk [vmem:[#allocation2 + $0x20] sm:$0xf] %vm882, %v842
          %892 = vst.msk [vmem:[#allocation2 + $0x24] sm:$0xf] %vm882, %v843
          %893 = vst.msk [vmem:[#allocation2 + $0x28] sm:$0xf] %vm882, %v844
          %894 = vst.msk [vmem:[#allocation2 + $0x2c] sm:$0xf] %vm882, %v845
          %895 = vst.msk [vmem:[#allocation2 + $0x30] sm:$0xf] %vm882, %v846
          %896 = vst.msk [vmem:[#allocation2 + $0x34] sm:$0xf] %vm882, %v847
          %897 = vst.msk [vmem:[#allocation2 + $0x38] sm:$0xf] %vm882, %v848
          %898 = vst.msk [vmem:[#allocation2 + $0x3c] sm:$0xf] %vm882, %v849
          %899 = vst.msk [vmem:[#allocation2 + $0x40] sm:$0xf] %vm882, %v850
          %900 = vst.msk [vmem:[#allocation2 + $0x44] sm:$0xf] %vm882, %v851
          %901 = vst.msk [vmem:[#allocation2 + $0x48] sm:$0xf] %vm882, %v852
          %902 = vst.msk [vmem:[#allocation2 + $0x4c] sm:$0xf] %vm882, %v853
          %903 = vst.msk [vmem:[#allocation2 + $0x50] sm:$0xf] %vm882, %v854
          %904 = vst.msk [vmem:[#allocation2 + $0x54] sm:$0xf] %vm882, %v855
          %905 = vst.msk [vmem:[#allocation2 + $0x58] sm:$0xf] %vm882, %v856
          %906 = vst.msk [vmem:[#allocation2 + $0x5c] sm:$0xf] %vm882, %v857
        $region72: #{tpu_custom_call.1} parent=47 // pred_fallthru
          _
        %v907 = vld [vmem:[#allocation2] sm:$0xf]
        %v908 = vld [vmem:[#allocation2 + $0x4] sm:$0xf]
        %v909 = vld [vmem:[#allocation2 + $0x8] sm:$0xf]
        %v910 = vld [vmem:[#allocation2 + $0xc] sm:$0xf]
        %v911 = vld [vmem:[#allocation2 + $0x10] sm:$0xf]
        %v912 = vld [vmem:[#allocation2 + $0x14] sm:$0xf]
        %v913 = vld [vmem:[#allocation2 + $0x18] sm:$0xf]
        %v914 = vld [vmem:[#allocation2 + $0x1c] sm:$0xf]
        %v915 = vld [vmem:[#allocation2 + $0x20] sm:$0xf]
        %v916 = vld [vmem:[#allocation2 + $0x24] sm:$0xf]
        %v917 = vld [vmem:[#allocation2 + $0x28] sm:$0xf]
        %v918 = vld [vmem:[#allocation2 + $0x2c] sm:$0xf]
        %v919 = vld [vmem:[#allocation2 + $0x30] sm:$0xf]
        %v920 = vld [vmem:[#allocation2 + $0x34] sm:$0xf]
        %v921 = vld [vmem:[#allocation2 + $0x38] sm:$0xf]
        %v922 = vld [vmem:[#allocation2 + $0x3c] sm:$0xf]
        %v923 = vld [vmem:[#allocation2 + $0x40] sm:$0xf]
        %v924 = vld [vmem:[#allocation2 + $0x44] sm:$0xf]
        %v925 = vld [vmem:[#allocation2 + $0x48] sm:$0xf]
        %v926 = vld [vmem:[#allocation2 + $0x4c] sm:$0xf]
        %v927 = vld [vmem:[#allocation2 + $0x50] sm:$0xf]
        %v928 = vld [vmem:[#allocation2 + $0x54] sm:$0xf]
        %v929 = vld [vmem:[#allocation2 + $0x58] sm:$0xf]
        %v930 = vld [vmem:[#allocation2 + $0x5c] sm:$0xf]
        %v934 = vunpack.c.l.b16 %v907
        %v935 = vunpack.c.l.b16 %v908
        %v936 = vunpack.c.l.b16 %v909
        %v937 = vpack.c.b16 %v935, %v934
        %v938 = vpack.c.b16 %v936, %v936
        %vm939 = vcmask 261120
        %v941 = vsel %vm939, %v492, 0
        %v944 = vsel %vm939, %v937, 0
        %v947 = vsel %vm939, %v938, 0
        %949 = vmatprep.subr.bf16.mxu0 0
        %950 = vmatpush1.bf16.xpose.msra.mxu0 %v944
        %951 = vmatprep.subr.bf16.mxu0 0
        %952 = vmatpush1.bf16.xpose.msra.mxu0 %v947
        %953 = vmatprep.subr.bf16.mxu0 0
        %954 = vmatpush1.bf16.xpose.msra.mxu0 0
        %955 = vmatprep.subr.bf16.mxu0 0
        %956 = vmatpush1.bf16.xpose.msra.mxu0 0
        %957 = vmatprep.subr.bf16.mxu0 0
        %958 = vmatpush1.bf16.xpose.msra.mxu0 0
        %959 = vmatprep.subr.bf16.mxu0 0
        %960 = vmatpush1.bf16.xpose.msra.mxu0 0
        %961 = vmatprep.subr.bf16.mxu0 0
        %962 = vmatpush1.bf16.xpose.msra.mxu0 0
        %963 = vmatprep.subr.bf16.mxu0 0
        %964 = vmatpush1.bf16.xpose.msra.mxu0 0
        %965 = vmatprep.subr.bf16.mxu0 0
        %966 = vmatpush1.bf16.xpose.msra.mxu0 0
        %967 = vmatprep.subr.bf16.mxu0 0
        %968 = vmatpush1.bf16.xpose.msra.mxu0 0
        %969 = vmatprep.subr.bf16.mxu0 0
        %970 = vmatpush1.bf16.xpose.msra.mxu0 0
        %971 = vmatprep.subr.bf16.mxu0 0
        %972 = vmatpush1.bf16.xpose.msra.mxu0 0
        %973 = vmatprep.subr.bf16.mxu0 0
        %974 = vmatpush1.bf16.xpose.msra.mxu0 0
        %975 = vmatprep.subr.bf16.mxu0 0
        %976 = vmatpush1.bf16.xpose.msra.mxu0 0
        %977 = vmatprep.subr.bf16.mxu0 0
        %978 = vmatpush1.bf16.xpose.msra.mxu0 0
        %979 = vmatprep.subr.bf16.mxu0 0
        %980 = vmatpush1.bf16.xpose.msra.mxu0 0
        %981 = vmatprep.mubr.bf16.mxu0 0
        %982 = vmatmul.mubr.bf16.gmra.mrb[0].mxu0 %v941
        %v983 = vpop.f32.mrb[0].mxu0
        %v984 = vadd.f32 0.0, %v983
        %v985 = vpop.f32.mrb[0].mxu0
        %v986 = vpop.f32.mrb[0].mxu0
        %v987 = vadd.f32 0.0, %v986
        %v988 = vpop.f32.mrb[0].mxu0
        %989 = vdwg.mxu0
        %v993 = vunpack.c.l.b16 %v910
        %v994 = vunpack.c.l.b16 %v911
        %v995 = vunpack.c.l.b16 %v912
        %v996 = vpack.c.b16 %v994, %v993
        %v997 = vpack.c.b16 %v995, %v995
        %v999 = vsel %vm939, %v493, 0
        %v1002 = vsel %vm939, %v996, 0
        %v1005 = vsel %vm939, %v997, 0
        %1007 = vmatprep.subr.bf16.mxu0 0
        %1008 = vmatpush1.bf16.xpose.msra.mxu0 %v1002
        %1009 = vmatprep.subr.bf16.mxu0 0
        %1010 = vmatpush1.bf16.xpose.msra.mxu0 %v1005
        %1011 = vmatprep.subr.bf16.mxu0 0
        %1012 = vmatpush1.bf16.xpose.msra.mxu0 0
        %1013 = vmatprep.subr.bf16.mxu0 0
        %1014 = vmatpush1.bf16.xpose.msra.mxu0 0
        %1015 = vmatprep.subr.bf16.mxu0 0
        %1016 = vmatpush1.bf16.xpose.msra.mxu0 0
        %1017 = vmatprep.subr.bf16.mxu0 0
        %1018 = vmatpush1.bf16.xpose.msra.mxu0 0
        %1019 = vmatprep.subr.bf16.mxu0 0
        %1020 = vmatpush1.bf16.xpose.msra.mxu0 0
        %1021 = vmatprep.subr.bf16.mxu0 0
        %1022 = vmatpush1.bf16.xpose.msra.mxu0 0
        %1023 = vmatprep.subr.bf16.mxu0 0
        %1024 = vmatpush1.bf16.xpose.msra.mxu0 0
        %1025 = vmatprep.subr.bf16.mxu0 0
        %1026 = vmatpush1.bf16.xpose.msra.mxu0 0
        %1027 = vmatprep.subr.bf16.mxu0 0
        %1028 = vmatpush1.bf16.xpose.msra.mxu0 0
        %1029 = vmatprep.subr.bf16.mxu0 0
        %1030 = vmatpush1.bf16.xpose.msra.mxu0 0
        %1031 = vmatprep.subr.bf16.mxu0 0
        %1032 = vmatpush1.bf16.xpose.msra.mxu0 0
        %1033 = vmatprep.subr.bf16.mxu0 0
        %1034 = vmatpush1.bf16.xpose.msra.mxu0 0
        %1035 = vmatprep.subr.bf16.mxu0 0
        %1036 = vmatpush1.bf16.xpose.msra.mxu0 0
        %1037 = vmatprep.subr.bf16.mxu0 0
        %1038 = vmatpush1.bf16.xpose.msra.mxu0 0
        %1039 = vmatprep.mubr.bf16.mxu0 0
        %1040 = vmatmul.mubr.bf16.gmra.mrb[0].mxu0 %v999
        %v1041 = vpop.f32.mrb[0].mxu0
        %v1042 = vadd.f32 0.0, %v1041
        %v1043 = vpop.f32.mrb[0].mxu0
        %v1044 = vpop.f32.mrb[0].mxu0
        %v1045 = vadd.f32 0.0, %v1044
        %v1046 = vpop.f32.mrb[0].mxu0
        %1047 = vdwg.mxu0
        %v1051 = vunpack.c.l.b16 %v913
        %v1052 = vunpack.c.l.b16 %v914
        %v1053 = vunpack.c.l.b16 %v915
        %v1054 = vpack.c.b16 %v1052, %v1051
        %v1055 = vpack.c.b16 %v1053, %v1053
        %v1057 = vsel %vm939, %v494, 0
        %v1060 = vsel %vm939, %v1054, 0
        %v1063 = vsel %vm939, %v1055, 0
        %1065 = vmatprep.subr.bf16.mxu0 0
        %1066 = vmatpush1.bf16.xpose.msra.mxu0 %v1060
        %1067 = vmatprep.subr.bf16.mxu0 0
        %1068 = vmatpush1.bf16.xpose.msra.mxu0 %v1063
        %1069 = vmatprep.subr.bf16.mxu0 0
        %1070 = vmatpush1.bf16.xpose.msra.mxu0 0
        %1071 = vmatprep.subr.bf16.mxu0 0
        %1072 = vmatpush1.bf16.xpose.msra.mxu0 0
        %1073 = vmatprep.subr.bf16.mxu0 0
        %1074 = vmatpush1.bf16.xpose.msra.mxu0 0
        %1075 = vmatprep.subr.bf16.mxu0 0
        %1076 = vmatpush1.bf16.xpose.msra.mxu0 0
        %1077 = vmatprep.subr.bf16.mxu0 0
        %1078 = vmatpush1.bf16.xpose.msra.mxu0 0
        %1079 = vmatprep.subr.bf16.mxu0 0
        %1080 = vmatpush1.bf16.xpose.msra.mxu0 0
        %1081 = vmatprep.subr.bf16.mxu0 0
        %1082 = vmatpush1.bf16.xpose.msra.mxu0 0
        %1083 = vmatprep.subr.bf16.mxu0 0
        %1084 = vmatpush1.bf16.xpose.msra.mxu0 0
        %1085 = vmatprep.subr.bf16.mxu0 0
        %1086 = vmatpush1.bf16.xpose.msra.mxu0 0
        %1087 = vmatprep.subr.bf16.mxu0 0
        %1088 = vmatpush1.bf16.xpose.msra.mxu0 0
        %1089 = vmatprep.subr.bf16.mxu0 0
        %1090 = vmatpush1.bf16.xpose.msra.mxu0 0
        %1091 = vmatprep.subr.bf16.mxu0 0
        %1092 = vmatpush1.bf16.xpose.msra.mxu0 0
        %1093 = vmatprep.subr.bf16.mxu0 0
        %1094 = vmatpush1.bf16.xpose.msra.mxu0 0
        %1095 = vmatprep.subr.bf16.mxu0 0
        %1096 = vmatpush1.bf16.xpose.msra.mxu0 0
        %1097 = vmatprep.mubr.bf16.mxu0 0
        %1098 = vmatmul.mubr.bf16.gmra.mrb[0].mxu0 %v1057
        %v1099 = vpop.f32.mrb[0].mxu0
        %v1100 = vadd.f32 0.0, %v1099
        %v1101 = vpop.f32.mrb[0].mxu0
        %v1102 = vpop.f32.mrb[0].mxu0
        %v1103 = vadd.f32 0.0, %v1102
        %v1104 = vpop.f32.mrb[0].mxu0
        %1105 = vdwg.mxu0
        %v1109 = vunpack.c.l.b16 %v916
        %v1110 = vunpack.c.l.b16 %v917
        %v1111 = vunpack.c.l.b16 %v918
        %v1112 = vpack.c.b16 %v1110, %v1109
        %v1113 = vpack.c.b16 %v1111, %v1111
        %v1115 = vsel %vm939, %v495, 0
        %v1118 = vsel %vm939, %v1112, 0
        %v1121 = vsel %vm939, %v1113, 0
        %1123 = vmatprep.subr.bf16.mxu0 0
        %1124 = vmatpush1.bf16.xpose.msra.mxu0 %v1118
        %1125 = vmatprep.subr.bf16.mxu0 0
        %1126 = vmatpush1.bf16.xpose.msra.mxu0 %v1121
        %1127 = vmatprep.subr.bf16.mxu0 0
        %1128 = vmatpush1.bf16.xpose.msra.mxu0 0
        %1129 = vmatprep.subr.bf16.mxu0 0
        %1130 = vmatpush1.bf16.xpose.msra.mxu0 0
        %1131 = vmatprep.subr.bf16.mxu0 0
        %1132 = vmatpush1.bf16.xpose.msra.mxu0 0
        %1133 = vmatprep.subr.bf16.mxu0 0
        %1134 = vmatpush1.bf16.xpose.msra.mxu0 0
        %1135 = vmatprep.subr.bf16.mxu0 0
        %1136 = vmatpush1.bf16.xpose.msra.mxu0 0
        %1137 = vmatprep.subr.bf16.mxu0 0
        %1138 = vmatpush1.bf16.xpose.msra.mxu0 0
        %1139 = vmatprep.subr.bf16.mxu0 0
        %1140 = vmatpush1.bf16.xpose.msra.mxu0 0
        %1141 = vmatprep.subr.bf16.mxu0 0
        %1142 = vmatpush1.bf16.xpose.msra.mxu0 0
        %1143 = vmatprep.subr.bf16.mxu0 0
        %1144 = vmatpush1.bf16.xpose.msra.mxu0 0
        %1145 = vmatprep.subr.bf16.mxu0 0
        %1146 = vmatpush1.bf16.xpose.msra.mxu0 0
        %1147 = vmatprep.subr.bf16.mxu0 0
        %1148 = vmatpush1.bf16.xpose.msra.mxu0 0
        %1149 = vmatprep.subr.bf16.mxu0 0
        %1150 = vmatpush1.bf16.xpose.msra.mxu0 0
        %1151 = vmatprep.subr.bf16.mxu0 0
        %1152 = vmatpush1.bf16.xpose.msra.mxu0 0
        %1153 = vmatprep.subr.bf16.mxu0 0
        %1154 = vmatpush1.bf16.xpose.msra.mxu0 0
        %1155 = vmatprep.mubr.bf16.mxu0 0
        %1156 = vmatmul.mubr.bf16.gmra.mrb[0].mxu0 %v1115
        %v1157 = vpop.f32.mrb[0].mxu0
        %v1158 = vadd.f32 0.0, %v1157
        %v1159 = vpop.f32.mrb[0].mxu0
        %v1160 = vpop.f32.mrb[0].mxu0
        %v1161 = vadd.f32 0.0, %v1160
        %v1162 = vpop.f32.mrb[0].mxu0
        %1163 = vdwg.mxu0
        %v1167 = vunpack.c.l.b16 %v919
        %v1168 = vunpack.c.l.b16 %v920
        %v1169 = vunpack.c.l.b16 %v921
        %v1170 = vpack.c.b16 %v1168, %v1167
        %v1171 = vpack.c.b16 %v1169, %v1169
        %v1173 = vsel %vm939, %v496, 0
        %v1176 = vsel %vm939, %v1170, 0
        %v1179 = vsel %vm939, %v1171, 0
        %1181 = vmatprep.subr.bf16.mxu0 0
        %1182 = vmatpush1.bf16.xpose.msra.mxu0 %v1176
        %1183 = vmatprep.subr.bf16.mxu0 0
        %1184 = vmatpush1.bf16.xpose.msra.mxu0 %v1179
        %1185 = vmatprep.subr.bf16.mxu0 0
        %1186 = vmatpush1.bf16.xpose.msra.mxu0 0
        %1187 = vmatprep.subr.bf16.mxu0 0
        %1188 = vmatpush1.bf16.xpose.msra.mxu0 0
        %1189 = vmatprep.subr.bf16.mxu0 0
        %1190 = vmatpush1.bf16.xpose.msra.mxu0 0
        %1191 = vmatprep.subr.bf16.mxu0 0
        %1192 = vmatpush1.bf16.xpose.msra.mxu0 0
        %1193 = vmatprep.subr.bf16.mxu0 0
        %1194 = vmatpush1.bf16.xpose.msra.mxu0 0
        %1195 = vmatprep.subr.bf16.mxu0 0
        %1196 = vmatpush1.bf16.xpose.msra.mxu0 0
        %1197 = vmatprep.subr.bf16.mxu0 0
        %1198 = vmatpush1.bf16.xpose.msra.mxu0 0
        %1199 = vmatprep.subr.bf16.mxu0 0
        %1200 = vmatpush1.bf16.xpose.msra.mxu0 0
        %1201 = vmatprep.subr.bf16.mxu0 0
        %1202 = vmatpush1.bf16.xpose.msra.mxu0 0
        %1203 = vmatprep.subr.bf16.mxu0 0
        %1204 = vmatpush1.bf16.xpose.msra.mxu0 0
        %1205 = vmatprep.subr.bf16.mxu0 0
        %1206 = vmatpush1.bf16.xpose.msra.mxu0 0
        %1207 = vmatprep.subr.bf16.mxu0 0
        %1208 = vmatpush1.bf16.xpose.msra.mxu0 0
        %1209 = vmatprep.subr.bf16.mxu0 0
        %1210 = vmatpush1.bf16.xpose.msra.mxu0 0
        %1211 = vmatprep.subr.bf16.mxu0 0
        %1212 = vmatpush1.bf16.xpose.msra.mxu0 0
        %1213 = vmatprep.mubr.bf16.mxu0 0
        %1214 = vmatmul.mubr.bf16.gmra.mrb[0].mxu0 %v1173
        %v1215 = vpop.f32.mrb[0].mxu0
        %v1216 = vadd.f32 0.0, %v1215
        %v1217 = vpop.f32.mrb[0].mxu0
        %v1218 = vpop.f32.mrb[0].mxu0
        %v1219 = vadd.f32 0.0, %v1218
        %v1220 = vpop.f32.mrb[0].mxu0
        %1221 = vdwg.mxu0
        %v1225 = vunpack.c.l.b16 %v922
        %v1226 = vunpack.c.l.b16 %v923
        %v1227 = vunpack.c.l.b16 %v924
        %v1228 = vpack.c.b16 %v1226, %v1225
        %v1229 = vpack.c.b16 %v1227, %v1227
        %v1231 = vsel %vm939, %v497, 0
        %v1234 = vsel %vm939, %v1228, 0
        %v1237 = vsel %vm939, %v1229, 0
        %1239 = vmatprep.subr.bf16.mxu0 0
        %1240 = vmatpush1.bf16.xpose.msra.mxu0 %v1234
        %1241 = vmatprep.subr.bf16.mxu0 0
        %1242 = vmatpush1.bf16.xpose.msra.mxu0 %v1237
        %1243 = vmatprep.subr.bf16.mxu0 0
        %1244 = vmatpush1.bf16.xpose.msra.mxu0 0
        %1245 = vmatprep.subr.bf16.mxu0 0
        %1246 = vmatpush1.bf16.xpose.msra.mxu0 0
        %1247 = vmatprep.subr.bf16.mxu0 0
        %1248 = vmatpush1.bf16.xpose.msra.mxu0 0
        %1249 = vmatprep.subr.bf16.mxu0 0
        %1250 = vmatpush1.bf16.xpose.msra.mxu0 0
        %1251 = vmatprep.subr.bf16.mxu0 0
        %1252 = vmatpush1.bf16.xpose.msra.mxu0 0
        %1253 = vmatprep.subr.bf16.mxu0 0
        %1254 = vmatpush1.bf16.xpose.msra.mxu0 0
        %1255 = vmatprep.subr.bf16.mxu0 0
        %1256 = vmatpush1.bf16.xpose.msra.mxu0 0
        %1257 = vmatprep.subr.bf16.mxu0 0
        %1258 = vmatpush1.bf16.xpose.msra.mxu0 0
        %1259 = vmatprep.subr.bf16.mxu0 0
        %1260 = vmatpush1.bf16.xpose.msra.mxu0 0
        %1261 = vmatprep.subr.bf16.mxu0 0
        %1262 = vmatpush1.bf16.xpose.msra.mxu0 0
        %1263 = vmatprep.subr.bf16.mxu0 0
        %1264 = vmatpush1.bf16.xpose.msra.mxu0 0
        %1265 = vmatprep.subr.bf16.mxu0 0
        %1266 = vmatpush1.bf16.xpose.msra.mxu0 0
        %1267 = vmatprep.subr.bf16.mxu0 0
        %1268 = vmatpush1.bf16.xpose.msra.mxu0 0
        %1269 = vmatprep.subr.bf16.mxu0 0
        %1270 = vmatpush1.bf16.xpose.msra.mxu0 0
        %1271 = vmatprep.mubr.bf16.mxu0 0
        %1272 = vmatmul.mubr.bf16.gmra.mrb[0].mxu0 %v1231
        %v1273 = vpop.f32.mrb[0].mxu0
        %v1274 = vadd.f32 0.0, %v1273
        %v1275 = vpop.f32.mrb[0].mxu0
        %v1276 = vpop.f32.mrb[0].mxu0
        %v1277 = vadd.f32 0.0, %v1276
        %v1278 = vpop.f32.mrb[0].mxu0
        %1279 = vdwg.mxu0
        %v1283 = vunpack.c.l.b16 %v925
        %v1284 = vunpack.c.l.b16 %v926
        %v1285 = vunpack.c.l.b16 %v927
        %v1286 = vpack.c.b16 %v1284, %v1283
        %v1287 = vpack.c.b16 %v1285, %v1285
        %v1289 = vsel %vm939, %v498, 0
        %v1292 = vsel %vm939, %v1286, 0
        %v1295 = vsel %vm939, %v1287, 0
        %1297 = vmatprep.subr.bf16.mxu0 0
        %1298 = vmatpush1.bf16.xpose.msra.mxu0 %v1292
        %1299 = vmatprep.subr.bf16.mxu0 0
        %1300 = vmatpush1.bf16.xpose.msra.mxu0 %v1295
        %1301 = vmatprep.subr.bf16.mxu0 0
        %1302 = vmatpush1.bf16.xpose.msra.mxu0 0
        %1303 = vmatprep.subr.bf16.mxu0 0
        %1304 = vmatpush1.bf16.xpose.msra.mxu0 0
        %1305 = vmatprep.subr.bf16.mxu0 0
        %1306 = vmatpush1.bf16.xpose.msra.mxu0 0
        %1307 = vmatprep.subr.bf16.mxu0 0
        %1308 = vmatpush1.bf16.xpose.msra.mxu0 0
        %1309 = vmatprep.subr.bf16.mxu0 0
        %1310 = vmatpush1.bf16.xpose.msra.mxu0 0
        %1311 = vmatprep.subr.bf16.mxu0 0
        %1312 = vmatpush1.bf16.xpose.msra.mxu0 0
        %1313 = vmatprep.subr.bf16.mxu0 0
        %1314 = vmatpush1.bf16.xpose.msra.mxu0 0
        %1315 = vmatprep.subr.bf16.mxu0 0
        %1316 = vmatpush1.bf16.xpose.msra.mxu0 0
        %1317 = vmatprep.subr.bf16.mxu0 0
        %1318 = vmatpush1.bf16.xpose.msra.mxu0 0
        %1319 = vmatprep.subr.bf16.mxu0 0
        %1320 = vmatpush1.bf16.xpose.msra.mxu0 0
        %1321 = vmatprep.subr.bf16.mxu0 0
        %1322 = vmatpush1.bf16.xpose.msra.mxu0 0
        %1323 = vmatprep.subr.bf16.mxu0 0
        %1324 = vmatpush1.bf16.xpose.msra.mxu0 0
        %1325 = vmatprep.subr.bf16.mxu0 0
        %1326 = vmatpush1.bf16.xpose.msra.mxu0 0
        %1327 = vmatprep.subr.bf16.mxu0 0
        %1328 = vmatpush1.bf16.xpose.msra.mxu0 0
        %1329 = vmatprep.mubr.bf16.mxu0 0
        %1330 = vmatmul.mubr.bf16.gmra.mrb[0].mxu0 %v1289
        %v1331 = vpop.f32.mrb[0].mxu0
        %v1332 = vadd.f32 0.0, %v1331
        %v1333 = vpop.f32.mrb[0].mxu0
        %v1334 = vpop.f32.mrb[0].mxu0
        %v1335 = vadd.f32 0.0, %v1334
        %v1336 = vpop.f32.mrb[0].mxu0
        %1337 = vdwg.mxu0
        %v1341 = vunpack.c.l.b16 %v928
        %v1342 = vunpack.c.l.b16 %v929
        %v1343 = vunpack.c.l.b16 %v930
        %v1344 = vpack.c.b16 %v1342, %v1341
        %v1345 = vpack.c.b16 %v1343, %v1343
        %v1347 = vsel %vm939, %v499, 0
        %v1350 = vsel %vm939, %v1344, 0
        %v1353 = vsel %vm939, %v1345, 0
        %1355 = vmatprep.subr.bf16.mxu0 0
        %1356 = vmatpush1.bf16.xpose.msra.mxu0 %v1350
        %1357 = vmatprep.subr.bf16.mxu0 0
        %1358 = vmatpush1.bf16.xpose.msra.mxu0 %v1353
        %1359 = vmatprep.subr.bf16.mxu0 0
        %1360 = vmatpush1.bf16.xpose.msra.mxu0 0
        %1361 = vmatprep.subr.bf16.mxu0 0
        %1362 = vmatpush1.bf16.xpose.msra.mxu0 0
        %1363 = vmatprep.subr.bf16.mxu0 0
        %1364 = vmatpush1.bf16.xpose.msra.mxu0 0
        %1365 = vmatprep.subr.bf16.mxu0 0
        %1366 = vmatpush1.bf16.xpose.msra.mxu0 0
        %1367 = vmatprep.subr.bf16.mxu0 0
        %1368 = vmatpush1.bf16.xpose.msra.mxu0 0
        %1369 = vmatprep.subr.bf16.mxu0 0
        %1370 = vmatpush1.bf16.xpose.msra.mxu0 0
        %1371 = vmatprep.subr.bf16.mxu0 0
        %1372 = vmatpush1.bf16.xpose.msra.mxu0 0
        %1373 = vmatprep.subr.bf16.mxu0 0
        %1374 = vmatpush1.bf16.xpose.msra.mxu0 0
        %1375 = vmatprep.subr.bf16.mxu0 0
        %1376 = vmatpush1.bf16.xpose.msra.mxu0 0
        %1377 = vmatprep.subr.bf16.mxu0 0
        %1378 = vmatpush1.bf16.xpose.msra.mxu0 0
        %1379 = vmatprep.subr.bf16.mxu0 0
        %1380 = vmatpush1.bf16.xpose.msra.mxu0 0
        %1381 = vmatprep.subr.bf16.mxu0 0
        %1382 = vmatpush1.bf16.xpose.msra.mxu0 0
        %1383 = vmatprep.subr.bf16.mxu0 0
        %1384 = vmatpush1.bf16.xpose.msra.mxu0 0
        %1385 = vmatprep.subr.bf16.mxu0 0
        %1386 = vmatpush1.bf16.xpose.msra.mxu0 0
        %1387 = vmatprep.mubr.bf16.mxu0 0
        %1388 = vmatmul.mubr.bf16.gmra.mrb[0].mxu0 %v1347
        %v1389 = vpop.f32.mrb[0].mxu0
        %v1390 = vadd.f32 0.0, %v1389
        %v1391 = vpop.f32.mrb[0].mxu0
        %v1392 = vpop.f32.mrb[0].mxu0
        %v1393 = vadd.f32 0.0, %v1392
        %v1394 = vpop.f32.mrb[0].mxu0
        %1395 = vdwg.mxu0
        %v1396 = vld [vmem:[%s412] sm:$0xff]
        %v1397 = vld [vmem:[%s412 + $0x8] sm:$0xff]
        %v1398 = vld [vmem:[%s412 + $0x10] sm:$0xff]
        %v1399 = vld [vmem:[%s412 + $0x18] sm:$0xff]
        %v1400 = vld [vmem:[%s412 + $0x20] sm:$0xff]
        %v1401 = vld [vmem:[%s412 + $0x28] sm:$0xff]
        %v1402 = vld [vmem:[%s412 + $0x30] sm:$0xff]
        %v1403 = vld [vmem:[%s412 + $0x38] sm:$0xff]
        %v1404 = vld [vmem:[%s412 + $0x40] sm:$0xff]
        %v1405 = vld [vmem:[%s412 + $0x48] sm:$0xff]
        %v1406 = vld [vmem:[%s412 + $0x50] sm:$0xff]
        %v1407 = vld [vmem:[%s412 + $0x58] sm:$0xff]
        %v1408 = vld [vmem:[%s412 + $0x60] sm:$0xff]
        %v1409 = vld [vmem:[%s412 + $0x68] sm:$0xff]
        %v1410 = vld [vmem:[%s412 + $0x70] sm:$0xff]
        %v1411 = vld [vmem:[%s412 + $0x78] sm:$0xff]
        %vm1412 = vcmp.ne.f32.partialorder %v1396, 0.0
        %vm1413 = vcmp.ne.f32.partialorder %v1397, 0.0
        %vm1414 = vcmp.ne.f32.partialorder %v1398, 0.0
        %vm1415 = vcmp.ne.f32.partialorder %v1399, 0.0
        %vm1416 = vcmp.ne.f32.partialorder %v1400, 0.0
        %vm1417 = vcmp.ne.f32.partialorder %v1401, 0.0
        %vm1418 = vcmp.ne.f32.partialorder %v1402, 0.0
        %vm1419 = vcmp.ne.f32.partialorder %v1403, 0.0
        %vm1420 = vcmp.ne.f32.partialorder %v1404, 0.0
        %vm1421 = vcmp.ne.f32.partialorder %v1405, 0.0
        %vm1422 = vcmp.ne.f32.partialorder %v1406, 0.0
        %vm1423 = vcmp.ne.f32.partialorder %v1407, 0.0
        %vm1424 = vcmp.ne.f32.partialorder %v1408, 0.0
        %vm1425 = vcmp.ne.f32.partialorder %v1409, 0.0
        %vm1426 = vcmp.ne.f32.partialorder %v1410, 0.0
        %vm1427 = vcmp.ne.f32.partialorder %v1411, 0.0
        %v1428 = vsel %vm1412, -1e-06, %v984
        %v1429 = vsel %vm1413, -1e-06, %v987
        %v1430 = vsel %vm1414, -1e-06, %v1042
        %v1431 = vsel %vm1415, -1e-06, %v1045
        %v1432 = vsel %vm1416, -1e-06, %v1100
        %v1433 = vsel %vm1417, -1e-06, %v1103
        %v1434 = vsel %vm1418, -1e-06, %v1158
        %v1435 = vsel %vm1419, -1e-06, %v1161
        %v1436 = vsel %vm1420, -1e-06, %v1216
        %v1437 = vsel %vm1421, -1e-06, %v1219
        %v1438 = vsel %vm1422, -1e-06, %v1274
        %v1439 = vsel %vm1423, -1e-06, %v1277
        %v1440 = vsel %vm1424, -1e-06, %v1332
        %v1441 = vsel %vm1425, -1e-06, %v1335
        %v1442 = vsel %vm1426, -1e-06, %v1390
        %v1443 = vsel %vm1427, -1e-06, %v1393
        %vm1444 = vcmask 195584
        %v1445 = vsel %vm1444, %v1428, -inf
        %1446 = vmax.xlane.f32.xlu0 %v1445
        %v1447 = vpop.xlane.xlu0 %1446
        %v1448 = vsel %vm1444, %v1429, -inf
        %1449 = vmax.xlane.f32.xlu0 %v1448
        %v1450 = vpop.xlane.xlu0 %1449
        %v1451 = vsel %vm1444, %v1430, -inf
        %1452 = vmax.xlane.f32.xlu0 %v1451
        %v1453 = vpop.xlane.xlu0 %1452
        %v1454 = vsel %vm1444, %v1431, -inf
        %1455 = vmax.xlane.f32.xlu0 %v1454
        %v1456 = vpop.xlane.xlu0 %1455
        %v1457 = vsel %vm1444, %v1432, -inf
        %1458 = vmax.xlane.f32.xlu0 %v1457
        %v1459 = vpop.xlane.xlu0 %1458
        %v1460 = vsel %vm1444, %v1433, -inf
        %1461 = vmax.xlane.f32.xlu0 %v1460
        %v1462 = vpop.xlane.xlu0 %1461
        %v1463 = vsel %vm1444, %v1434, -inf
        %1464 = vmax.xlane.f32.xlu0 %v1463
        %v1465 = vpop.xlane.xlu0 %1464
        %v1466 = vsel %vm1444, %v1435, -inf
        %1467 = vmax.xlane.f32.xlu0 %v1466
        %v1468 = vpop.xlane.xlu0 %1467
        %v1469 = vsel %vm1444, %v1436, -inf
        %1470 = vmax.xlane.f32.xlu0 %v1469
        %v1471 = vpop.xlane.xlu0 %1470
        %v1472 = vsel %vm1444, %v1437, -inf
        %1473 = vmax.xlane.f32.xlu0 %v1472
        %v1474 = vpop.xlane.xlu0 %1473
        %v1475 = vsel %vm1444, %v1438, -inf
        %1476 = vmax.xlane.f32.xlu0 %v1475
        %v1477 = vpop.xlane.xlu0 %1476
        %v1478 = vsel %vm1444, %v1439, -inf
        %1479 = vmax.xlane.f32.xlu0 %v1478
        %v1480 = vpop.xlane.xlu0 %1479
        %v1481 = vsel %vm1444, %v1440, -inf
        %1482 = vmax.xlane.f32.xlu0 %v1481
        %v1483 = vpop.xlane.xlu0 %1482
        %v1484 = vsel %vm1444, %v1441, -inf
        %1485 = vmax.xlane.f32.xlu0 %v1484
        %v1486 = vpop.xlane.xlu0 %1485
        %v1487 = vsel %vm1444, %v1442, -inf
        %1488 = vmax.xlane.f32.xlu0 %v1487
        %v1489 = vpop.xlane.xlu0 %1488
        %v1490 = vsel %vm1444, %v1443, -inf
        %1491 = vmax.xlane.f32.xlu0 %v1490
        %v1492 = vpop.xlane.xlu0 %1491
        %v1493 = vsub.f32 %v1428, %v1447
        %v1494 = vsub.f32 %v1429, %v1450
        %v1495 = vsub.f32 %v1430, %v1453
        %v1496 = vsub.f32 %v1431, %v1456
        %v1497 = vsub.f32 %v1432, %v1459
        %v1498 = vsub.f32 %v1433, %v1462
        %v1499 = vsub.f32 %v1434, %v1465
        %v1500 = vsub.f32 %v1435, %v1468
        %v1501 = vsub.f32 %v1436, %v1471
        %v1502 = vsub.f32 %v1437, %v1474
        %v1503 = vsub.f32 %v1438, %v1477
        %v1504 = vsub.f32 %v1439, %v1480
        %v1505 = vsub.f32 %v1440, %v1483
        %v1506 = vsub.f32 %v1441, %v1486
        %v1507 = vsub.f32 %v1442, %v1489
        %v1508 = vsub.f32 %v1443, %v1492
        %v1509 = vmul.f32 %v1493, 1.442695
        %v1510 = vpow.pop %v1509
        %v1511 = vmul.f32 %v1494, 1.442695
        %v1512 = vpow.pop %v1511
        %v1513 = vmul.f32 %v1495, 1.442695
        %v1514 = vpow.pop %v1513
        %v1515 = vmul.f32 %v1496, 1.442695
        %v1516 = vpow.pop %v1515
        %v1517 = vmul.f32 %v1497, 1.442695
        %v1518 = vpow.pop %v1517
        %v1519 = vmul.f32 %v1498, 1.442695
        %v1520 = vpow.pop %v1519
        %v1521 = vmul.f32 %v1499, 1.442695
        %v1522 = vpow.pop %v1521
        %v1523 = vmul.f32 %v1500, 1.442695
        %v1524 = vpow.pop %v1523
        %v1525 = vmul.f32 %v1501, 1.442695
        %v1526 = vpow.pop %v1525
        %v1527 = vmul.f32 %v1502, 1.442695
        %v1528 = vpow.pop %v1527
        %v1529 = vmul.f32 %v1503, 1.442695
        %v1530 = vpow.pop %v1529
        %v1531 = vmul.f32 %v1504, 1.442695
        %v1532 = vpow.pop %v1531
        %v1533 = vmul.f32 %v1505, 1.442695
        %v1534 = vpow.pop %v1533
        %v1535 = vmul.f32 %v1506, 1.442695
        %v1536 = vpow.pop %v1535
        %v1537 = vmul.f32 %v1507, 1.442695
        %v1538 = vpow.pop %v1537
        %v1539 = vmul.f32 %v1508, 1.442695
        %v1540 = vpow.pop %v1539
        %v1541 = vsel %vm1444, %v1510, 0.0
        %1542 = vadd.xlane.f32.xlu0 %v1541
        %v1543 = vpop.xlane.xlu0 %1542
        %v1544 = vsel %vm1444, %v1512, 0.0
        %1545 = vadd.xlane.f32.xlu0 %v1544
        %v1546 = vpop.xlane.xlu0 %1545
        %v1547 = vsel %vm1444, %v1514, 0.0
        %1548 = vadd.xlane.f32.xlu0 %v1547
        %v1549 = vpop.xlane.xlu0 %1548
        %v1550 = vsel %vm1444, %v1516, 0.0
        %1551 = vadd.xlane.f32.xlu0 %v1550
        %v1552 = vpop.xlane.xlu0 %1551
        %v1553 = vsel %vm1444, %v1518, 0.0
        %1554 = vadd.xlane.f32.xlu0 %v1553
        %v1555 = vpop.xlane.xlu0 %1554
        %v1556 = vsel %vm1444, %v1520, 0.0
        %1557 = vadd.xlane.f32.xlu0 %v1556
        %v1558 = vpop.xlane.xlu0 %1557
        %v1559 = vsel %vm1444, %v1522, 0.0
        %1560 = vadd.xlane.f32.xlu0 %v1559
        %v1561 = vpop.xlane.xlu0 %1560
        %v1562 = vsel %vm1444, %v1524, 0.0
        %1563 = vadd.xlane.f32.xlu0 %v1562
        %v1564 = vpop.xlane.xlu0 %1563
        %v1565 = vsel %vm1444, %v1526, 0.0
        %1566 = vadd.xlane.f32.xlu0 %v1565
        %v1567 = vpop.xlane.xlu0 %1566
        %v1568 = vsel %vm1444, %v1528, 0.0
        %1569 = vadd.xlane.f32.xlu0 %v1568
        %v1570 = vpop.xlane.xlu0 %1569
        %v1571 = vsel %vm1444, %v1530, 0.0
        %1572 = vadd.xlane.f32.xlu0 %v1571
        %v1573 = vpop.xlane.xlu0 %1572
        %v1574 = vsel %vm1444, %v1532, 0.0
        %1575 = vadd.xlane.f32.xlu0 %v1574
        %v1576 = vpop.xlane.xlu0 %1575
        %v1577 = vsel %vm1444, %v1534, 0.0
        %1578 = vadd.xlane.f32.xlu0 %v1577
        %v1579 = vpop.xlane.xlu0 %1578
        %v1580 = vsel %vm1444, %v1536, 0.0
        %1581 = vadd.xlane.f32.xlu0 %v1580
        %v1582 = vpop.xlane.xlu0 %1581
        %v1583 = vsel %vm1444, %v1538, 0.0
        %1584 = vadd.xlane.f32.xlu0 %v1583
        %v1585 = vpop.xlane.xlu0 %1584
        %v1586 = vsel %vm1444, %v1540, 0.0
        %1587 = vadd.xlane.f32.xlu0 %v1586
        %v1588 = vpop.xlane.xlu0 %1587
        %v1589 = vrcp.pop %v1543
        %v1590 = vmul.f32 1.0, %v1589
        %v1591 = vrcp.pop %v1546
        %v1592 = vmul.f32 1.0, %v1591
        %v1593 = vrcp.pop %v1549
        %v1594 = vmul.f32 1.0, %v1593
        %v1595 = vrcp.pop %v1552
        %v1596 = vmul.f32 1.0, %v1595
        %v1597 = vrcp.pop %v1555
        %v1598 = vmul.f32 1.0, %v1597
        %v1599 = vrcp.pop %v1558
        %v1600 = vmul.f32 1.0, %v1599
        %v1601 = vrcp.pop %v1561
        %v1602 = vmul.f32 1.0, %v1601
        %v1603 = vrcp.pop %v1564
        %v1604 = vmul.f32 1.0, %v1603
        %v1605 = vrcp.pop %v1567
        %v1606 = vmul.f32 1.0, %v1605
        %v1607 = vrcp.pop %v1570
        %v1608 = vmul.f32 1.0, %v1607
        %v1609 = vrcp.pop %v1573
        %v1610 = vmul.f32 1.0, %v1609
        %v1611 = vrcp.pop %v1576
        %v1612 = vmul.f32 1.0, %v1611
        %v1613 = vrcp.pop %v1579
        %v1614 = vmul.f32 1.0, %v1613
        %v1615 = vrcp.pop %v1582
        %v1616 = vmul.f32 1.0, %v1615
        %v1617 = vrcp.pop %v1585
        %v1618 = vmul.f32 1.0, %v1617
        %v1619 = vrcp.pop %v1588
        %v1620 = vmul.f32 1.0, %v1619
        %v1621 = vmul.f32 %v1510, %v1590
        %v1622 = vmul.f32 %v1512, %v1592
        %v1623 = vmul.f32 %v1514, %v1594
        %v1624 = vmul.f32 %v1516, %v1596
        %v1625 = vmul.f32 %v1518, %v1598
        %v1626 = vmul.f32 %v1520, %v1600
        %v1627 = vmul.f32 %v1522, %v1602
        %v1628 = vmul.f32 %v1524, %v1604
        %v1629 = vmul.f32 %v1526, %v1606
        %v1630 = vmul.f32 %v1528, %v1608
        %v1631 = vmul.f32 %v1530, %v1610
        %v1632 = vmul.f32 %v1532, %v1612
        %v1633 = vmul.f32 %v1534, %v1614
        %v1634 = vmul.f32 %v1536, %v1616
        %v1635 = vmul.f32 %v1538, %v1618
        %v1636 = vmul.f32 %v1540, %v1620
        %v1637 = vpack.c.bf16 %v1622, %v1621
        %v1638 = vpack.c.bf16 %v1624, %v1623
        %v1639 = vpack.c.bf16 %v1626, %v1625
        %v1640 = vpack.c.bf16 %v1628, %v1627
        %v1641 = vpack.c.bf16 %v1630, %v1629
        %v1642 = vpack.c.bf16 %v1632, %v1631
        %v1643 = vpack.c.bf16 %v1634, %v1633
        %v1644 = vpack.c.bf16 %v1636, %v1635
        %v1646 = vsel %vm1444, %v1637, 0
        %vm1648 = vcmask 1043456
        %v1650 = vsel %vm1648, %v525, 0
        %1652 = vmatprep.subr.bf16.mxu0 0
        %1653 = vmatpush1.bf16.msra.mxu0 %v524
        %1654 = vmatprep.subr.bf16.mxu0 0
        %1655 = vmatpush1.bf16.msra.mxu0 %v1650
        %1656 = vmatprep.subr.bf16.mxu0 0
        %1657 = vmatpush1.bf16.msra.mxu0 0
        %1658 = vmatprep.subr.bf16.mxu0 0
        %1659 = vmatpush1.bf16.msra.mxu0 0
        %1660 = vmatprep.subr.bf16.mxu0 0
        %1661 = vmatpush1.bf16.msra.mxu0 0
        %1662 = vmatprep.subr.bf16.mxu0 0
        %1663 = vmatpush1.bf16.msra.mxu0 0
        %1664 = vmatprep.subr.bf16.mxu0 0
        %1665 = vmatpush1.bf16.msra.mxu0 0
        %1666 = vmatprep.subr.bf16.mxu0 0
        %1667 = vmatpush1.bf16.msra.mxu0 0
        %1668 = vmatprep.subr.bf16.mxu0 0
        %1669 = vmatpush1.bf16.msra.mxu0 0
        %1670 = vmatprep.subr.bf16.mxu0 0
        %1671 = vmatpush1.bf16.msra.mxu0 0
        %1672 = vmatprep.subr.bf16.mxu0 0
        %1673 = vmatpush1.bf16.msra.mxu0 0
        %1674 = vmatprep.subr.bf16.mxu0 0
        %1675 = vmatpush1.bf16.msra.mxu0 0
        %1676 = vmatprep.subr.bf16.mxu0 0
        %1677 = vmatpush1.bf16.msra.mxu0 0
        %1678 = vmatprep.subr.bf16.mxu0 0
        %1679 = vmatpush1.bf16.msra.mxu0 0
        %1680 = vmatprep.subr.bf16.mxu0 0
        %1681 = vmatpush1.bf16.msra.mxu0 0
        %1682 = vmatprep.subr.bf16.mxu0 0
        %1683 = vmatpush1.bf16.msra.mxu0 0
        %1684 = vmatprep.mubr.bf16.mxu0 0
        %1685 = vmatmul.mubr.bf16.gmra.mrb[0].mxu0 %v1646
        %v1686 = vpop.f32.mrb[0].mxu0
        %v1687 = vadd.f32 0.0, %v1686
        %v1688 = vpop.f32.mrb[0].mxu0
        %v1689 = vpop.f32.mrb[0].mxu0
        %v1690 = vadd.f32 0.0, %v1689
        %v1691 = vpop.f32.mrb[0].mxu0
        %1692 = vdwg.mxu0
        %v1694 = vsel %vm1444, %v1638, 0
        %v1697 = vsel %vm1648, %v527, 0
        %1699 = vmatprep.subr.bf16.mxu0 0
        %1700 = vmatpush1.bf16.msra.mxu0 %v526
        %1701 = vmatprep.subr.bf16.mxu0 0
        %1702 = vmatpush1.bf16.msra.mxu0 %v1697
        %1703 = vmatprep.subr.bf16.mxu0 0
        %1704 = vmatpush1.bf16.msra.mxu0 0
        %1705 = vmatprep.subr.bf16.mxu0 0
        %1706 = vmatpush1.bf16.msra.mxu0 0
        %1707 = vmatprep.subr.bf16.mxu0 0
        %1708 = vmatpush1.bf16.msra.mxu0 0
        %1709 = vmatprep.subr.bf16.mxu0 0
        %1710 = vmatpush1.bf16.msra.mxu0 0
        %1711 = vmatprep.subr.bf16.mxu0 0
        %1712 = vmatpush1.bf16.msra.mxu0 0
        %1713 = vmatprep.subr.bf16.mxu0 0
        %1714 = vmatpush1.bf16.msra.mxu0 0
        %1715 = vmatprep.subr.bf16.mxu0 0
        %1716 = vmatpush1.bf16.msra.mxu0 0
        %1717 = vmatprep.subr.bf16.mxu0 0
        %1718 = vmatpush1.bf16.msra.mxu0 0
        %1719 = vmatprep.subr.bf16.mxu0 0
        %1720 = vmatpush1.bf16.msra.mxu0 0
        %1721 = vmatprep.subr.bf16.mxu0 0
        %1722 = vmatpush1.bf16.msra.mxu0 0
        %1723 = vmatprep.subr.bf16.mxu0 0
        %1724 = vmatpush1.bf16.msra.mxu0 0
        %1725 = vmatprep.subr.bf16.mxu0 0
        %1726 = vmatpush1.bf16.msra.mxu0 0
        %1727 = vmatprep.subr.bf16.mxu0 0
        %1728 = vmatpush1.bf16.msra.mxu0 0
        %1729 = vmatprep.subr.bf16.mxu0 0
        %1730 = vmatpush1.bf16.msra.mxu0 0
        %1731 = vmatprep.mubr.bf16.mxu0 0
        %1732 = vmatmul.mubr.bf16.gmra.mrb[0].mxu0 %v1694
        %v1733 = vpop.f32.mrb[0].mxu0
        %v1734 = vadd.f32 0.0, %v1733
        %v1735 = vpop.f32.mrb[0].mxu0
        %v1736 = vpop.f32.mrb[0].mxu0
        %v1737 = vadd.f32 0.0, %v1736
        %v1738 = vpop.f32.mrb[0].mxu0
        %1739 = vdwg.mxu0
        %v1741 = vsel %vm1444, %v1639, 0
        %v1744 = vsel %vm1648, %v529, 0
        %1746 = vmatprep.subr.bf16.mxu0 0
        %1747 = vmatpush1.bf16.msra.mxu0 %v528
        %1748 = vmatprep.subr.bf16.mxu0 0
        %1749 = vmatpush1.bf16.msra.mxu0 %v1744
        %1750 = vmatprep.subr.bf16.mxu0 0
        %1751 = vmatpush1.bf16.msra.mxu0 0
        %1752 = vmatprep.subr.bf16.mxu0 0
        %1753 = vmatpush1.bf16.msra.mxu0 0
        %1754 = vmatprep.subr.bf16.mxu0 0
        %1755 = vmatpush1.bf16.msra.mxu0 0
        %1756 = vmatprep.subr.bf16.mxu0 0
        %1757 = vmatpush1.bf16.msra.mxu0 0
        %1758 = vmatprep.subr.bf16.mxu0 0
        %1759 = vmatpush1.bf16.msra.mxu0 0
        %1760 = vmatprep.subr.bf16.mxu0 0
        %1761 = vmatpush1.bf16.msra.mxu0 0
        %1762 = vmatprep.subr.bf16.mxu0 0
        %1763 = vmatpush1.bf16.msra.mxu0 0
        %1764 = vmatprep.subr.bf16.mxu0 0
        %1765 = vmatpush1.bf16.msra.mxu0 0
        %1766 = vmatprep.subr.bf16.mxu0 0
        %1767 = vmatpush1.bf16.msra.mxu0 0
        %1768 = vmatprep.subr.bf16.mxu0 0
        %1769 = vmatpush1.bf16.msra.mxu0 0
        %1770 = vmatprep.subr.bf16.mxu0 0
        %1771 = vmatpush1.bf16.msra.mxu0 0
        %1772 = vmatprep.subr.bf16.mxu0 0
        %1773 = vmatpush1.bf16.msra.mxu0 0
        %1774 = vmatprep.subr.bf16.mxu0 0
        %1775 = vmatpush1.bf16.msra.mxu0 0
        %1776 = vmatprep.subr.bf16.mxu0 0
        %1777 = vmatpush1.bf16.msra.mxu0 0
        %1778 = vmatprep.mubr.bf16.mxu0 0
        %1779 = vmatmul.mubr.bf16.gmra.mrb[0].mxu0 %v1741
        %v1780 = vpop.f32.mrb[0].mxu0
        %v1781 = vadd.f32 0.0, %v1780
        %v1782 = vpop.f32.mrb[0].mxu0
        %v1783 = vpop.f32.mrb[0].mxu0
        %v1784 = vadd.f32 0.0, %v1783
        %v1785 = vpop.f32.mrb[0].mxu0
        %1786 = vdwg.mxu0
        %v1788 = vsel %vm1444, %v1640, 0
        %v1791 = vsel %vm1648, %v531, 0
        %1793 = vmatprep.subr.bf16.mxu0 0
        %1794 = vmatpush1.bf16.msra.mxu0 %v530
        %1795 = vmatprep.subr.bf16.mxu0 0
        %1796 = vmatpush1.bf16.msra.mxu0 %v1791
        %1797 = vmatprep.subr.bf16.mxu0 0
        %1798 = vmatpush1.bf16.msra.mxu0 0
        %1799 = vmatprep.subr.bf16.mxu0 0
        %1800 = vmatpush1.bf16.msra.mxu0 0
        %1801 = vmatprep.subr.bf16.mxu0 0
        %1802 = vmatpush1.bf16.msra.mxu0 0
        %1803 = vmatprep.subr.bf16.mxu0 0
        %1804 = vmatpush1.bf16.msra.mxu0 0
        %1805 = vmatprep.subr.bf16.mxu0 0
        %1806 = vmatpush1.bf16.msra.mxu0 0
        %1807 = vmatprep.subr.bf16.mxu0 0
        %1808 = vmatpush1.bf16.msra.mxu0 0
        %1809 = vmatprep.subr.bf16.mxu0 0
        %1810 = vmatpush1.bf16.msra.mxu0 0
        %1811 = vmatprep.subr.bf16.mxu0 0
        %1812 = vmatpush1.bf16.msra.mxu0 0
        %1813 = vmatprep.subr.bf16.mxu0 0
        %1814 = vmatpush1.bf16.msra.mxu0 0
        %1815 = vmatprep.subr.bf16.mxu0 0
        %1816 = vmatpush1.bf16.msra.mxu0 0
        %1817 = vmatprep.subr.bf16.mxu0 0
        %1818 = vmatpush1.bf16.msra.mxu0 0
        %1819 = vmatprep.subr.bf16.mxu0 0
        %1820 = vmatpush1.bf16.msra.mxu0 0
        %1821 = vmatprep.subr.bf16.mxu0 0
        %1822 = vmatpush1.bf16.msra.mxu0 0
        %1823 = vmatprep.subr.bf16.mxu0 0
        %1824 = vmatpush1.bf16.msra.mxu0 0
        %1825 = vmatprep.mubr.bf16.mxu0 0
        %1826 = vmatmul.mubr.bf16.gmra.mrb[0].mxu0 %v1788
        %v1827 = vpop.f32.mrb[0].mxu0
        %v1828 = vadd.f32 0.0, %v1827
        %v1829 = vpop.f32.mrb[0].mxu0
        %v1830 = vpop.f32.mrb[0].mxu0
        %v1831 = vadd.f32 0.0, %v1830
        %v1832 = vpop.f32.mrb[0].mxu0
        %1833 = vdwg.mxu0
        %v1835 = vsel %vm1444, %v1641, 0
        %v1838 = vsel %vm1648, %v533, 0
        %1840 = vmatprep.subr.bf16.mxu0 0
        %1841 = vmatpush1.bf16.msra.mxu0 %v532
        %1842 = vmatprep.subr.bf16.mxu0 0
        %1843 = vmatpush1.bf16.msra.mxu0 %v1838
        %1844 = vmatprep.subr.bf16.mxu0 0
        %1845 = vmatpush1.bf16.msra.mxu0 0
        %1846 = vmatprep.subr.bf16.mxu0 0
        %1847 = vmatpush1.bf16.msra.mxu0 0
        %1848 = vmatprep.subr.bf16.mxu0 0
        %1849 = vmatpush1.bf16.msra.mxu0 0
        %1850 = vmatprep.subr.bf16.mxu0 0
        %1851 = vmatpush1.bf16.msra.mxu0 0
        %1852 = vmatprep.subr.bf16.mxu0 0
        %1853 = vmatpush1.bf16.msra.mxu0 0
        %1854 = vmatprep.subr.bf16.mxu0 0
        %1855 = vmatpush1.bf16.msra.mxu0 0
        %1856 = vmatprep.subr.bf16.mxu0 0
        %1857 = vmatpush1.bf16.msra.mxu0 0
        %1858 = vmatprep.subr.bf16.mxu0 0
        %1859 = vmatpush1.bf16.msra.mxu0 0
        %1860 = vmatprep.subr.bf16.mxu0 0
        %1861 = vmatpush1.bf16.msra.mxu0 0
        %1862 = vmatprep.subr.bf16.mxu0 0
        %1863 = vmatpush1.bf16.msra.mxu0 0
        %1864 = vmatprep.subr.bf16.mxu0 0
        %1865 = vmatpush1.bf16.msra.mxu0 0
        %1866 = vmatprep.subr.bf16.mxu0 0
        %1867 = vmatpush1.bf16.msra.mxu0 0
        %1868 = vmatprep.subr.bf16.mxu0 0
        %1869 = vmatpush1.bf16.msra.mxu0 0
        %1870 = vmatprep.subr.bf16.mxu0 0
        %1871 = vmatpush1.bf16.msra.mxu0 0
        %1872 = vmatprep.mubr.bf16.mxu0 0
        %1873 = vmatmul.mubr.bf16.gmra.mrb[0].mxu0 %v1835
        %v1874 = vpop.f32.mrb[0].mxu0
        %v1875 = vadd.f32 0.0, %v1874
        %v1876 = vpop.f32.mrb[0].mxu0
        %v1877 = vpop.f32.mrb[0].mxu0
        %v1878 = vadd.f32 0.0, %v1877
        %v1879 = vpop.f32.mrb[0].mxu0
        %1880 = vdwg.mxu0
        %v1882 = vsel %vm1444, %v1642, 0
        %v1885 = vsel %vm1648, %v535, 0
        %1887 = vmatprep.subr.bf16.mxu0 0
        %1888 = vmatpush1.bf16.msra.mxu0 %v534
        %1889 = vmatprep.subr.bf16.mxu0 0
        %1890 = vmatpush1.bf16.msra.mxu0 %v1885
        %1891 = vmatprep.subr.bf16.mxu0 0
        %1892 = vmatpush1.bf16.msra.mxu0 0
        %1893 = vmatprep.subr.bf16.mxu0 0
        %1894 = vmatpush1.bf16.msra.mxu0 0
        %1895 = vmatprep.subr.bf16.mxu0 0
        %1896 = vmatpush1.bf16.msra.mxu0 0
        %1897 = vmatprep.subr.bf16.mxu0 0
        %1898 = vmatpush1.bf16.msra.mxu0 0
        %1899 = vmatprep.subr.bf16.mxu0 0
        %1900 = vmatpush1.bf16.msra.mxu0 0
        %1901 = vmatprep.subr.bf16.mxu0 0
        %1902 = vmatpush1.bf16.msra.mxu0 0
        %1903 = vmatprep.subr.bf16.mxu0 0
        %1904 = vmatpush1.bf16.msra.mxu0 0
        %1905 = vmatprep.subr.bf16.mxu0 0
        %1906 = vmatpush1.bf16.msra.mxu0 0
        %1907 = vmatprep.subr.bf16.mxu0 0
        %1908 = vmatpush1.bf16.msra.mxu0 0
        %1909 = vmatprep.subr.bf16.mxu0 0
        %1910 = vmatpush1.bf16.msra.mxu0 0
        %1911 = vmatprep.subr.bf16.mxu0 0
        %1912 = vmatpush1.bf16.msra.mxu0 0
        %1913 = vmatprep.subr.bf16.mxu0 0
        %1914 = vmatpush1.bf16.msra.mxu0 0
        %1915 = vmatprep.subr.bf16.mxu0 0
        %1916 = vmatpush1.bf16.msra.mxu0 0
        %1917 = vmatprep.subr.bf16.mxu0 0
        %1918 = vmatpush1.bf16.msra.mxu0 0
        %1919 = vmatprep.mubr.bf16.mxu0 0
        %1920 = vmatmul.mubr.bf16.gmra.mrb[0].mxu0 %v1882
        %v1921 = vpop.f32.mrb[0].mxu0
        %v1922 = vadd.f32 0.0, %v1921
        %v1923 = vpop.f32.mrb[0].mxu0
        %v1924 = vpop.f32.mrb[0].mxu0
        %v1925 = vadd.f32 0.0, %v1924
        %v1926 = vpop.f32.mrb[0].mxu0
        %1927 = vdwg.mxu0
        %v1929 = vsel %vm1444, %v1643, 0
        %v1932 = vsel %vm1648, %v537, 0
        %1934 = vmatprep.subr.bf16.mxu0 0
        %1935 = vmatpush1.bf16.msra.mxu0 %v536
        %1936 = vmatprep.subr.bf16.mxu0 0
        %1937 = vmatpush1.bf16.msra.mxu0 %v1932
        %1938 = vmatprep.subr.bf16.mxu0 0
        %1939 = vmatpush1.bf16.msra.mxu0 0
        %1940 = vmatprep.subr.bf16.mxu0 0
        %1941 = vmatpush1.bf16.msra.mxu0 0
        %1942 = vmatprep.subr.bf16.mxu0 0
        %1943 = vmatpush1.bf16.msra.mxu0 0
        %1944 = vmatprep.subr.bf16.mxu0 0
        %1945 = vmatpush1.bf16.msra.mxu0 0
        %1946 = vmatprep.subr.bf16.mxu0 0
        %1947 = vmatpush1.bf16.msra.mxu0 0
        %1948 = vmatprep.subr.bf16.mxu0 0
        %1949 = vmatpush1.bf16.msra.mxu0 0
        %1950 = vmatprep.subr.bf16.mxu0 0
        %1951 = vmatpush1.bf16.msra.mxu0 0
        %1952 = vmatprep.subr.bf16.mxu0 0
        %1953 = vmatpush1.bf16.msra.mxu0 0
        %1954 = vmatprep.subr.bf16.mxu0 0
        %1955 = vmatpush1.bf16.msra.mxu0 0
        %1956 = vmatprep.subr.bf16.mxu0 0
        %1957 = vmatpush1.bf16.msra.mxu0 0
        %1958 = vmatprep.subr.bf16.mxu0 0
        %1959 = vmatpush1.bf16.msra.mxu0 0
        %1960 = vmatprep.subr.bf16.mxu0 0
        %1961 = vmatpush1.bf16.msra.mxu0 0
        %1962 = vmatprep.subr.bf16.mxu0 0
        %1963 = vmatpush1.bf16.msra.mxu0 0
        %1964 = vmatprep.subr.bf16.mxu0 0
        %1965 = vmatpush1.bf16.msra.mxu0 0
        %1966 = vmatprep.mubr.bf16.mxu0 0
        %1967 = vmatmul.mubr.bf16.gmra.mrb[0].mxu0 %v1929
        %v1968 = vpop.f32.mrb[0].mxu0
        %v1969 = vadd.f32 0.0, %v1968
        %v1970 = vpop.f32.mrb[0].mxu0
        %v1971 = vpop.f32.mrb[0].mxu0
        %v1972 = vadd.f32 0.0, %v1971
        %v1973 = vpop.f32.mrb[0].mxu0
        %1974 = vdwg.mxu0
        %v1976 = vsel %vm1444, %v1644, 0
        %v1979 = vsel %vm1648, %v539, 0
        %1981 = vmatprep.subr.bf16.mxu0 0
        %1982 = vmatpush1.bf16.msra.mxu0 %v538
        %1983 = vmatprep.subr.bf16.mxu0 0
        %1984 = vmatpush1.bf16.msra.mxu0 %v1979
        %1985 = vmatprep.subr.bf16.mxu0 0
        %1986 = vmatpush1.bf16.msra.mxu0 0
        %1987 = vmatprep.subr.bf16.mxu0 0
        %1988 = vmatpush1.bf16.msra.mxu0 0
        %1989 = vmatprep.subr.bf16.mxu0 0
        %1990 = vmatpush1.bf16.msra.mxu0 0
        %1991 = vmatprep.subr.bf16.mxu0 0
        %1992 = vmatpush1.bf16.msra.mxu0 0
        %1993 = vmatprep.subr.bf16.mxu0 0
        %1994 = vmatpush1.bf16.msra.mxu0 0
        %1995 = vmatprep.subr.bf16.mxu0 0
        %1996 = vmatpush1.bf16.msra.mxu0 0
        %1997 = vmatprep.subr.bf16.mxu0 0
        %1998 = vmatpush1.bf16.msra.mxu0 0
        %1999 = vmatprep.subr.bf16.mxu0 0
        %2000 = vmatpush1.bf16.msra.mxu0 0
        %2001 = vmatprep.subr.bf16.mxu0 0
        %2002 = vmatpush1.bf16.msra.mxu0 0
        %2003 = vmatprep.subr.bf16.mxu0 0
        %2004 = vmatpush1.bf16.msra.mxu0 0
        %2005 = vmatprep.subr.bf16.mxu0 0
        %2006 = vmatpush1.bf16.msra.mxu0 0
        %2007 = vmatprep.subr.bf16.mxu0 0
        %2008 = vmatpush1.bf16.msra.mxu0 0
        %2009 = vmatprep.subr.bf16.mxu0 0
        %2010 = vmatpush1.bf16.msra.mxu0 0
        %2011 = vmatprep.subr.bf16.mxu0 0
        %2012 = vmatpush1.bf16.msra.mxu0 0
        %2013 = vmatprep.mubr.bf16.mxu0 0
        %2014 = vmatmul.mubr.bf16.gmra.mrb[0].mxu0 %v1976
        %v2015 = vpop.f32.mrb[0].mxu0
        %v2016 = vadd.f32 0.0, %v2015
        %v2017 = vpop.f32.mrb[0].mxu0
        %v2018 = vpop.f32.mrb[0].mxu0
        %v2019 = vadd.f32 0.0, %v2018
        %v2020 = vpop.f32.mrb[0].mxu0
        %2021 = vdwg.mxu0
        %v2022 = vpack.c.bf16 %v1690, %v1687
        %v2023 = vpack.c.bf16 %v1737, %v1734
        %v2024 = vpack.c.bf16 %v1784, %v1781
        %v2025 = vpack.c.bf16 %v1831, %v1828
        %v2026 = vpack.c.bf16 %v1878, %v1875
        %v2027 = vpack.c.bf16 %v1925, %v1922
        %v2028 = vpack.c.bf16 %v1972, %v1969
        %v2029 = vpack.c.bf16 %v2019, %v2016
        %v2030 = vld [vmem:[#allocation11] sm:$0xf]
        %v2031 = vld [vmem:[#allocation11 + $0x4] sm:$0xf]
        %v2032 = vld [vmem:[#allocation11 + $0x8] sm:$0xf]
        %v2033 = vld [vmem:[#allocation11 + $0xc] sm:$0xf]
        %v2034 = vld [vmem:[%s5] sm:$0xf]
        %v2035 = vld [vmem:[%s5 + $0x4] sm:$0xf]
        %v2036 = vld [vmem:[%s5 + $0x8] sm:$0xf]
        %v2037 = vld [vmem:[%s5 + $0xc] sm:$0xf]
        %v2042 = vunpack.c.l.b16 %v2034
        %v2043 = vunpack.c.l.b16 %v2035
        %v2044 = vunpack.c.l.b16 %v2036
        %v2045 = vunpack.c.l.b16 %v2037
        %v2046 = vpack.c.b16 %v2043, %v2042
        %v2047 = vpack.c.b16 %v2045, %v2044
        %2050 = vmatprep.subr.bf16.mxu0 0
        %2051 = vmatpush1.bf16.msra.mxu0 %v2046
        %2052 = vmatprep.subr.bf16.mxu0 0
        %2053 = vmatpush1.bf16.msra.mxu0 %v2047
        %2054 = vmatprep.subr.bf16.mxu0 0
        %2055 = vmatpush1.bf16.msra.mxu0 0
        %2056 = vmatprep.subr.bf16.mxu0 0
        %2057 = vmatpush1.bf16.msra.mxu0 0
        %2058 = vmatprep.subr.bf16.mxu0 0
        %2059 = vmatpush1.bf16.msra.mxu0 0
        %2060 = vmatprep.subr.bf16.mxu0 0
        %2061 = vmatpush1.bf16.msra.mxu0 0
        %2062 = vmatprep.subr.bf16.mxu0 0
        %2063 = vmatpush1.bf16.msra.mxu0 0
        %2064 = vmatprep.subr.bf16.mxu0 0
        %2065 = vmatpush1.bf16.msra.mxu0 0
        %2066 = vmatprep.subr.bf16.mxu0 0
        %2067 = vmatpush1.bf16.msra.mxu0 0
        %2068 = vmatprep.subr.bf16.mxu0 0
        %2069 = vmatpush1.bf16.msra.mxu0 0
        %2070 = vmatprep.subr.bf16.mxu0 0
        %2071 = vmatpush1.bf16.msra.mxu0 0
        %2072 = vmatprep.subr.bf16.mxu0 0
        %2073 = vmatpush1.bf16.msra.mxu0 0
        %2074 = vmatprep.subr.bf16.mxu0 0
        %2075 = vmatpush1.bf16.msra.mxu0 0
        %2076 = vmatprep.subr.bf16.mxu0 0
        %2077 = vmatpush1.bf16.msra.mxu0 0
        %2078 = vmatprep.subr.bf16.mxu0 0
        %2079 = vmatpush1.bf16.msra.mxu0 0
        %2080 = vmatprep.subr.bf16.mxu0 0
        %2081 = vmatpush1.bf16.msra.mxu0 0
        %2082 = vmatprep.mubr.bf16.mxu0 0
        %2083 = vmatmul.mubr.bf16.gmra.mrb[0].mxu0 %v941
        %v2084 = vpop.f32.mrb[0].mxu0
        %v2085 = vadd.f32 0.0, %v2084
        %v2086 = vpop.f32.mrb[0].mxu0
        %v2087 = vpop.f32.mrb[0].mxu0
        %v2088 = vadd.f32 0.0, %v2087
        %v2089 = vpop.f32.mrb[0].mxu0
        %2090 = vmatprep.mubr.bf16.mxu0 0
        %2091 = vmatmul.mubr.bf16.gmra.mrb[0].mxu0 %v999
        %v2092 = vpop.f32.mrb[0].mxu0
        %v2093 = vadd.f32 0.0, %v2092
        %v2094 = vpop.f32.mrb[0].mxu0
        %v2095 = vpop.f32.mrb[0].mxu0
        %v2096 = vadd.f32 0.0, %v2095
        %v2097 = vpop.f32.mrb[0].mxu0
        %2098 = vmatprep.mubr.bf16.mxu0 0
        %2099 = vmatmul.mubr.bf16.gmra.mrb[0].mxu0 %v1057
        %v2100 = vpop.f32.mrb[0].mxu0
        %v2101 = vadd.f32 0.0, %v2100
        %v2102 = vpop.f32.mrb[0].mxu0
        %v2103 = vpop.f32.mrb[0].mxu0
        %v2104 = vadd.f32 0.0, %v2103
        %v2105 = vpop.f32.mrb[0].mxu0
        %2106 = vmatprep.mubr.bf16.mxu0 0
        %2107 = vmatmul.mubr.bf16.gmra.mrb[0].mxu0 %v1115
        %v2108 = vpop.f32.mrb[0].mxu0
        %v2109 = vadd.f32 0.0, %v2108
        %v2110 = vpop.f32.mrb[0].mxu0
        %v2111 = vpop.f32.mrb[0].mxu0
        %v2112 = vadd.f32 0.0, %v2111
        %v2113 = vpop.f32.mrb[0].mxu0
        %2114 = vmatprep.mubr.bf16.mxu0 0
        %2115 = vmatmul.mubr.bf16.gmra.mrb[0].mxu0 %v1173
        %v2116 = vpop.f32.mrb[0].mxu0
        %v2117 = vadd.f32 0.0, %v2116
        %v2118 = vpop.f32.mrb[0].mxu0
        %v2119 = vpop.f32.mrb[0].mxu0
        %v2120 = vadd.f32 0.0, %v2119
        %v2121 = vpop.f32.mrb[0].mxu0
        %2122 = vmatprep.mubr.bf16.mxu0 0
        %2123 = vmatmul.mubr.bf16.gmra.mrb[0].mxu0 %v1231
        %v2124 = vpop.f32.mrb[0].mxu0
        %v2125 = vadd.f32 0.0, %v2124
        %v2126 = vpop.f32.mrb[0].mxu0
        %v2127 = vpop.f32.mrb[0].mxu0
        %v2128 = vadd.f32 0.0, %v2127
        %v2129 = vpop.f32.mrb[0].mxu0
        %2130 = vmatprep.mubr.bf16.mxu0 0
        %2131 = vmatmul.mubr.bf16.gmra.mrb[0].mxu0 %v1289
        %v2132 = vpop.f32.mrb[0].mxu0
        %v2133 = vadd.f32 0.0, %v2132
        %v2134 = vpop.f32.mrb[0].mxu0
        %v2135 = vpop.f32.mrb[0].mxu0
        %v2136 = vadd.f32 0.0, %v2135
        %v2137 = vpop.f32.mrb[0].mxu0
        %2138 = vmatprep.mubr.bf16.mxu0 0
        %2139 = vmatmul.mubr.bf16.gmra.mrb[0].mxu0 %v1347
        %v2140 = vpop.f32.mrb[0].mxu0
        %v2141 = vadd.f32 0.0, %v2140
        %v2142 = vpop.f32.mrb[0].mxu0
        %v2143 = vpop.f32.mrb[0].mxu0
        %v2144 = vadd.f32 0.0, %v2143
        %v2145 = vpop.f32.mrb[0].mxu0
        %2146 = vdwg.mxu0
        %v2151 = vunpack.c.l.b16 %v2030
        %v2152 = vunpack.c.l.b16 %v2031
        %v2153 = vunpack.c.l.b16 %v2032
        %v2154 = vunpack.c.l.b16 %v2033
        %v2155 = vpack.c.b16 %v2152, %v2151
        %v2156 = vpack.c.b16 %v2154, %v2153
        %v2160 = vsel %vm939, %v2022, 0
        %v2163 = vsel %vm939, %v2023, 0
        %v2166 = vsel %vm939, %v2024, 0
        %v2169 = vsel %vm939, %v2025, 0
        %v2172 = vsel %vm939, %v2026, 0
        %v2175 = vsel %vm939, %v2027, 0
        %v2178 = vsel %vm939, %v2028, 0
        %v2181 = vsel %vm939, %v2029, 0
        %2183 = vmatprep.subr.bf16.mxu0 0
        %2184 = vmatpush1.bf16.msra.mxu0 %v2155
        %2185 = vmatprep.subr.bf16.mxu0 0
        %2186 = vmatpush1.bf16.msra.mxu0 %v2156
        %2187 = vmatprep.subr.bf16.mxu0 0
        %2188 = vmatpush1.bf16.msra.mxu0 0
        %2189 = vmatprep.subr.bf16.mxu0 0
        %2190 = vmatpush1.bf16.msra.mxu0 0
        %2191 = vmatprep.subr.bf16.mxu0 0
        %2192 = vmatpush1.bf16.msra.mxu0 0
        %2193 = vmatprep.subr.bf16.mxu0 0
        %2194 = vmatpush1.bf16.msra.mxu0 0
        %2195 = vmatprep.subr.bf16.mxu0 0
        %2196 = vmatpush1.bf16.msra.mxu0 0
        %2197 = vmatprep.subr.bf16.mxu0 0
        %2198 = vmatpush1.bf16.msra.mxu0 0
        %2199 = vmatprep.subr.bf16.mxu0 0
        %2200 = vmatpush1.bf16.msra.mxu0 0
        %2201 = vmatprep.subr.bf16.mxu0 0
        %2202 = vmatpush1.bf16.msra.mxu0 0
        %2203 = vmatprep.subr.bf16.mxu0 0
        %2204 = vmatpush1.bf16.msra.mxu0 0
        %2205 = vmatprep.subr.bf16.mxu0 0
        %2206 = vmatpush1.bf16.msra.mxu0 0
        %2207 = vmatprep.subr.bf16.mxu0 0
        %2208 = vmatpush1.bf16.msra.mxu0 0
        %2209 = vmatprep.subr.bf16.mxu0 0
        %2210 = vmatpush1.bf16.msra.mxu0 0
        %2211 = vmatprep.subr.bf16.mxu0 0
        %2212 = vmatpush1.bf16.msra.mxu0 0
        %2213 = vmatprep.subr.bf16.mxu0 0
        %2214 = vmatpush1.bf16.msra.mxu0 0
        %2215 = vmatprep.mubr.bf16.mxu0 0
        %2216 = vmatmul.mubr.bf16.gmra.mrb[0].mxu0 %v2160
        %v2217 = vpop.f32.mrb[0].mxu0
        %v2218 = vadd.f32 %v2085, %v2217
        %v2219 = vpop.f32.mrb[0].mxu0
        %v2220 = vpop.f32.mrb[0].mxu0
        %v2221 = vadd.f32 %v2088, %v2220
        %v2222 = vpop.f32.mrb[0].mxu0
        %2223 = vmatprep.mubr.bf16.mxu0 0
        %2224 = vmatmul.mubr.bf16.gmra.mrb[0].mxu0 %v2163
        %v2225 = vpop.f32.mrb[0].mxu0
        %v2226 = vadd.f32 %v2093, %v2225
        %v2227 = vpop.f32.mrb[0].mxu0
        %v2228 = vpop.f32.mrb[0].mxu0
        %v2229 = vadd.f32 %v2096, %v2228
        %v2230 = vpop.f32.mrb[0].mxu0
        %2231 = vmatprep.mubr.bf16.mxu0 0
        %2232 = vmatmul.mubr.bf16.gmra.mrb[0].mxu0 %v2166
        %v2233 = vpop.f32.mrb[0].mxu0
        %v2234 = vadd.f32 %v2101, %v2233
        %v2235 = vpop.f32.mrb[0].mxu0
        %v2236 = vpop.f32.mrb[0].mxu0
        %v2237 = vadd.f32 %v2104, %v2236
        %v2238 = vpop.f32.mrb[0].mxu0
        %2239 = vmatprep.mubr.bf16.mxu0 0
        %2240 = vmatmul.mubr.bf16.gmra.mrb[0].mxu0 %v2169
        %v2241 = vpop.f32.mrb[0].mxu0
        %v2242 = vadd.f32 %v2109, %v2241
        %v2243 = vpop.f32.mrb[0].mxu0
        %v2244 = vpop.f32.mrb[0].mxu0
        %v2245 = vadd.f32 %v2112, %v2244
        %v2246 = vpop.f32.mrb[0].mxu0
        %2247 = vmatprep.mubr.bf16.mxu0 0
        %2248 = vmatmul.mubr.bf16.gmra.mrb[0].mxu0 %v2172
        %v2249 = vpop.f32.mrb[0].mxu0
        %v2250 = vadd.f32 %v2117, %v2249
        %v2251 = vpop.f32.mrb[0].mxu0
        %v2252 = vpop.f32.mrb[0].mxu0
        %v2253 = vadd.f32 %v2120, %v2252
        %v2254 = vpop.f32.mrb[0].mxu0
        %2255 = vmatprep.mubr.bf16.mxu0 0
        %2256 = vmatmul.mubr.bf16.gmra.mrb[0].mxu0 %v2175
        %v2257 = vpop.f32.mrb[0].mxu0
        %v2258 = vadd.f32 %v2125, %v2257
        %v2259 = vpop.f32.mrb[0].mxu0
        %v2260 = vpop.f32.mrb[0].mxu0
        %v2261 = vadd.f32 %v2128, %v2260
        %v2262 = vpop.f32.mrb[0].mxu0
        %2263 = vmatprep.mubr.bf16.mxu0 0
        %2264 = vmatmul.mubr.bf16.gmra.mrb[0].mxu0 %v2178
        %v2265 = vpop.f32.mrb[0].mxu0
        %v2266 = vadd.f32 %v2133, %v2265
        %v2267 = vpop.f32.mrb[0].mxu0
        %v2268 = vpop.f32.mrb[0].mxu0
        %v2269 = vadd.f32 %v2136, %v2268
        %v2270 = vpop.f32.mrb[0].mxu0
        %2271 = vmatprep.mubr.bf16.mxu0 0
        %2272 = vmatmul.mubr.bf16.gmra.mrb[0].mxu0 %v2181
        %v2273 = vpop.f32.mrb[0].mxu0
        %v2274 = vadd.f32 %v2141, %v2273
        %v2275 = vpop.f32.mrb[0].mxu0
        %v2276 = vpop.f32.mrb[0].mxu0
        %v2277 = vadd.f32 %v2144, %v2276
        %v2278 = vpop.f32.mrb[0].mxu0
        %2279 = vdwg.mxu0
        %v2280 = vld [vmem:[%s6] sm:$0x1]
        %v2282 = vlaneseq
        %v2283 = vshrl.u32 %v2282, 7
        %v2284 = vsub.s32 0, %v2283
        %v2285 = vrot.slane %v2280, %v2284
        %v2287 = vadd.f32 %v2218, %v2285
        %v2288 = vadd.f32 %v2221, %v2285
        %v2289 = vadd.f32 %v2226, %v2285
        %v2290 = vadd.f32 %v2229, %v2285
        %v2291 = vadd.f32 %v2234, %v2285
        %v2292 = vadd.f32 %v2237, %v2285
        %v2293 = vadd.f32 %v2242, %v2285
        %v2294 = vadd.f32 %v2245, %v2285
        %v2295 = vadd.f32 %v2250, %v2285
        %v2296 = vadd.f32 %v2253, %v2285
        %v2297 = vadd.f32 %v2258, %v2285
        %v2298 = vadd.f32 %v2261, %v2285
        %v2299 = vadd.f32 %v2266, %v2285
        %v2300 = vadd.f32 %v2269, %v2285
        %v2301 = vadd.f32 %v2274, %v2285
        %v2302 = vadd.f32 %v2277, %v2285
        %v2303 = vtanh.pop %v2287
        %v2304 = vtanh.pop %v2288
        %v2305 = vtanh.pop %v2289
        %v2306 = vtanh.pop %v2290
        %v2307 = vtanh.pop %v2291
        %v2308 = vtanh.pop %v2292
        %v2309 = vtanh.pop %v2293
        %v2310 = vtanh.pop %v2294
        %v2311 = vtanh.pop %v2295
        %v2312 = vtanh.pop %v2296
        %v2313 = vtanh.pop %v2297
        %v2314 = vtanh.pop %v2298
        %v2315 = vtanh.pop %v2299
        %v2316 = vtanh.pop %v2300
        %v2317 = vtanh.pop %v2301
        %v2318 = vtanh.pop %v2302
        %v2319 = vcombine.low %v2303, %v2307
        %v2320 = vcombine.high %v2303, %v2307
        %v2322 = vunpack.c.l.s4 1983009808
        %v2323 = vunpack.c.0.s8 %v2322
        %v2324 = vlaneseq
        %v2325 = vshrl.u32 %v2324, 7
        %v2326 = vsub.s32 %v2323, %v2325
        %v2327 = vrot.slane %v2319, %v2326
        %v2329 = vunpack.c.l.s4 1983009808
        %v2330 = vunpack.c.0.s8 %v2329
        %v2331 = vlaneseq
        %v2332 = vshrl.u32 %v2331, 7
        %v2333 = vsub.s32 %v2330, %v2332
        %v2334 = vrot.slane %v2320, %v2333
        %v2335 = vcombine.low %v2305, %v2309
        %v2336 = vcombine.high %v2305, %v2309
        %v2338 = vunpack.c.l.s4 1983009808
        %v2339 = vunpack.c.0.s8 %v2338
        %v2340 = vlaneseq
        %v2341 = vshrl.u32 %v2340, 7
        %v2342 = vsub.s32 %v2339, %v2341
        %v2343 = vrot.slane %v2335, %v2342
        %v2345 = vunpack.c.l.s4 1983009808
        %v2346 = vunpack.c.0.s8 %v2345
        %v2347 = vlaneseq
        %v2348 = vshrl.u32 %v2347, 7
        %v2349 = vsub.s32 %v2346, %v2348
        %v2350 = vrot.slane %v2336, %v2349
        %v2351 = vcombine.low %v2311, %v2315
        %v2352 = vcombine.high %v2311, %v2315
        %v2354 = vunpack.c.l.s4 1983009808
        %v2355 = vunpack.c.0.s8 %v2354
        %v2356 = vlaneseq
        %v2357 = vshrl.u32 %v2356, 7
        %v2358 = vsub.s32 %v2355, %v2357
        %v2359 = vrot.slane %v2351, %v2358
        %v2361 = vunpack.c.l.s4 1983009808
        %v2362 = vunpack.c.0.s8 %v2361
        %v2363 = vlaneseq
        %v2364 = vshrl.u32 %v2363, 7
        %v2365 = vsub.s32 %v2362, %v2364
        %v2366 = vrot.slane %v2352, %v2365
        %v2367 = vcombine.low %v2313, %v2317
        %v2368 = vcombine.high %v2313, %v2317
        %v2370 = vunpack.c.l.s4 1983009808
        %v2371 = vunpack.c.0.s8 %v2370
        %v2372 = vlaneseq
        %v2373 = vshrl.u32 %v2372, 7
        %v2374 = vsub.s32 %v2371, %v2373
        %v2375 = vrot.slane %v2367, %v2374
        %v2377 = vunpack.c.l.s4 1983009808
        %v2378 = vunpack.c.0.s8 %v2377
        %v2379 = vlaneseq
        %v2380 = vshrl.u32 %v2379, 7
        %v2381 = vsub.s32 %v2378, %v2380
        %v2382 = vrot.slane %v2368, %v2381
        %v2383 = vcombine.low %v2327, %v2343
        %v2384 = vcombine.high %v2327, %v2343
        %v2386 = vunpack.c.l.s4 1934713408
        %v2387 = vunpack.c.0.s8 %v2386
        %v2388 = vlaneseq
        %v2389 = vshrl.u32 %v2388, 7
        %v2390 = vsub.s32 %v2387, %v2389
        %v2391 = vrot.slane %v2383, %v2390
        %v2393 = vunpack.c.l.s4 1934713408
        %v2394 = vunpack.c.0.s8 %v2393
        %v2395 = vlaneseq
        %v2396 = vshrl.u32 %v2395, 7
        %v2397 = vsub.s32 %v2394, %v2396
        %v2398 = vrot.slane %v2384, %v2397
        %v2399 = vcombine.low %v2334, %v2350
        %v2400 = vcombine.high %v2334, %v2350
        %v2402 = vunpack.c.l.s4 1934713408
        %v2403 = vunpack.c.0.s8 %v2402
        %v2404 = vlaneseq
        %v2405 = vshrl.u32 %v2404, 7
        %v2406 = vsub.s32 %v2403, %v2405
        %v2407 = vrot.slane %v2399, %v2406
        %v2409 = vunpack.c.l.s4 1934713408
        %v2410 = vunpack.c.0.s8 %v2409
        %v2411 = vlaneseq
        %v2412 = vshrl.u32 %v2411, 7
        %v2413 = vsub.s32 %v2410, %v2412
        %v2414 = vrot.slane %v2400, %v2413
        %v2415 = vcombine.low %v2359, %v2375
        %v2416 = vcombine.high %v2359, %v2375
        %v2418 = vunpack.c.l.s4 1934713408
        %v2419 = vunpack.c.0.s8 %v2418
        %v2420 = vlaneseq
        %v2421 = vshrl.u32 %v2420, 7
        %v2422 = vsub.s32 %v2419, %v2421
        %v2423 = vrot.slane %v2415, %v2422
        %v2425 = vunpack.c.l.s4 1934713408
        %v2426 = vunpack.c.0.s8 %v2425
        %v2427 = vlaneseq
        %v2428 = vshrl.u32 %v2427, 7
        %v2429 = vsub.s32 %v2426, %v2428
        %v2430 = vrot.slane %v2416, %v2429
        %v2431 = vcombine.low %v2366, %v2382
        %v2432 = vcombine.high %v2366, %v2382
        %v2434 = vunpack.c.l.s4 1934713408
        %v2435 = vunpack.c.0.s8 %v2434
        %v2436 = vlaneseq
        %v2437 = vshrl.u32 %v2436, 7
        %v2438 = vsub.s32 %v2435, %v2437
        %v2439 = vrot.slane %v2431, %v2438
        %v2441 = vunpack.c.l.s4 1934713408
        %v2442 = vunpack.c.0.s8 %v2441
        %v2443 = vlaneseq
        %v2444 = vshrl.u32 %v2443, 7
        %v2445 = vsub.s32 %v2442, %v2444
        %v2446 = vrot.slane %v2432, %v2445
        %v2447 = vcombine.low %v2391, %v2423
        %v2448 = vcombine.high %v2391, %v2423
        %v2449 = vcombine.low %v2398, %v2430
        %v2450 = vcombine.high %v2398, %v2430
        %v2451 = vcombine.low %v2407, %v2439
        %v2452 = vcombine.high %v2407, %v2439
        %v2453 = vcombine.low %v2414, %v2446
        %v2454 = vcombine.high %v2414, %v2446
        %v2455 = vcombine.low %v2304, %v2308
        %v2456 = vcombine.high %v2304, %v2308
        %v2458 = vunpack.c.l.s4 1983009808
        %v2459 = vunpack.c.0.s8 %v2458
        %v2460 = vlaneseq
        %v2461 = vshrl.u32 %v2460, 7
        %v2462 = vsub.s32 %v2459, %v2461
        %v2463 = vrot.slane %v2455, %v2462
        %v2465 = vunpack.c.l.s4 1983009808
        %v2466 = vunpack.c.0.s8 %v2465
        %v2467 = vlaneseq
        %v2468 = vshrl.u32 %v2467, 7
        %v2469 = vsub.s32 %v2466, %v2468
        %v2470 = vrot.slane %v2456, %v2469
        %v2471 = vcombine.low %v2306, %v2310
        %v2472 = vcombine.high %v2306, %v2310
        %v2474 = vunpack.c.l.s4 1983009808
        %v2475 = vunpack.c.0.s8 %v2474
        %v2476 = vlaneseq
        %v2477 = vshrl.u32 %v2476, 7
        %v2478 = vsub.s32 %v2475, %v2477
        %v2479 = vrot.slane %v2471, %v2478
        %v2481 = vunpack.c.l.s4 1983009808
        %v2482 = vunpack.c.0.s8 %v2481
        %v2483 = vlaneseq
        %v2484 = vshrl.u32 %v2483, 7
        %v2485 = vsub.s32 %v2482, %v2484
        %v2486 = vrot.slane %v2472, %v2485
        %v2487 = vcombine.low %v2312, %v2316
        %v2488 = vcombine.high %v2312, %v2316
        %v2490 = vunpack.c.l.s4 1983009808
        %v2491 = vunpack.c.0.s8 %v2490
        %v2492 = vlaneseq
        %v2493 = vshrl.u32 %v2492, 7
        %v2494 = vsub.s32 %v2491, %v2493
        %v2495 = vrot.slane %v2487, %v2494
        %v2497 = vunpack.c.l.s4 1983009808
        %v2498 = vunpack.c.0.s8 %v2497
        %v2499 = vlaneseq
        %v2500 = vshrl.u32 %v2499, 7
        %v2501 = vsub.s32 %v2498, %v2500
        %v2502 = vrot.slane %v2488, %v2501
        %v2503 = vcombine.low %v2314, %v2318
        %v2504 = vcombine.high %v2314, %v2318
        %v2506 = vunpack.c.l.s4 1983009808
        %v2507 = vunpack.c.0.s8 %v2506
        %v2508 = vlaneseq
        %v2509 = vshrl.u32 %v2508, 7
        %v2510 = vsub.s32 %v2507, %v2509
        %v2511 = vrot.slane %v2503, %v2510
        %v2513 = vunpack.c.l.s4 1983009808
        %v2514 = vunpack.c.0.s8 %v2513
        %v2515 = vlaneseq
        %v2516 = vshrl.u32 %v2515, 7
        %v2517 = vsub.s32 %v2514, %v2516
        %v2518 = vrot.slane %v2504, %v2517
        %v2519 = vcombine.low %v2463, %v2479
        %v2520 = vcombine.high %v2463, %v2479
        %v2522 = vunpack.c.l.s4 1934713408
        %v2523 = vunpack.c.0.s8 %v2522
        %v2524 = vlaneseq
        %v2525 = vshrl.u32 %v2524, 7
        %v2526 = vsub.s32 %v2523, %v2525
        %v2527 = vrot.slane %v2519, %v2526
        %v2529 = vunpack.c.l.s4 1934713408
        %v2530 = vunpack.c.0.s8 %v2529
        %v2531 = vlaneseq
        %v2532 = vshrl.u32 %v2531, 7
        %v2533 = vsub.s32 %v2530, %v2532
        %v2534 = vrot.slane %v2520, %v2533
        %v2535 = vcombine.low %v2470, %v2486
        %v2536 = vcombine.high %v2470, %v2486
        %v2538 = vunpack.c.l.s4 1934713408
        %v2539 = vunpack.c.0.s8 %v2538
        %v2540 = vlaneseq
        %v2541 = vshrl.u32 %v2540, 7
        %v2542 = vsub.s32 %v2539, %v2541
        %v2543 = vrot.slane %v2535, %v2542
        %v2545 = vunpack.c.l.s4 1934713408
        %v2546 = vunpack.c.0.s8 %v2545
        %v2547 = vlaneseq
        %v2548 = vshrl.u32 %v2547, 7
        %v2549 = vsub.s32 %v2546, %v2548
        %v2550 = vrot.slane %v2536, %v2549
        %v2551 = vcombine.low %v2495, %v2511
        %v2552 = vcombine.high %v2495, %v2511
        %v2554 = vunpack.c.l.s4 1934713408
        %v2555 = vunpack.c.0.s8 %v2554
        %v2556 = vlaneseq
        %v2557 = vshrl.u32 %v2556, 7
        %v2558 = vsub.s32 %v2555, %v2557
        %v2559 = vrot.slane %v2551, %v2558
        %v2561 = vunpack.c.l.s4 1934713408
        %v2562 = vunpack.c.0.s8 %v2561
        %v2563 = vlaneseq
        %v2564 = vshrl.u32 %v2563, 7
        %v2565 = vsub.s32 %v2562, %v2564
        %v2566 = vrot.slane %v2552, %v2565
        %v2567 = vcombine.low %v2502, %v2518
        %v2568 = vcombine.high %v2502, %v2518
        %v2570 = vunpack.c.l.s4 1934713408
        %v2571 = vunpack.c.0.s8 %v2570
        %v2572 = vlaneseq
        %v2573 = vshrl.u32 %v2572, 7
        %v2574 = vsub.s32 %v2571, %v2573
        %v2575 = vrot.slane %v2567, %v2574
        %v2577 = vunpack.c.l.s4 1934713408
        %v2578 = vunpack.c.0.s8 %v2577
        %v2579 = vlaneseq
        %v2580 = vshrl.u32 %v2579, 7
        %v2581 = vsub.s32 %v2578, %v2580
        %v2582 = vrot.slane %v2568, %v2581
        %v2583 = vcombine.low %v2527, %v2559
        %v2584 = vcombine.high %v2527, %v2559
        %v2585 = vcombine.low %v2534, %v2566
        %v2586 = vcombine.high %v2534, %v2566
        %v2587 = vcombine.low %v2543, %v2575
        %v2588 = vcombine.high %v2543, %v2575
        %v2589 = vcombine.low %v2550, %v2582
        %v2590 = vcombine.high %v2550, %v2582
        %2592 = vrot.lane.b32.xlu0 %v2448, 32
        %v2593 = vpop.permute.xlu0 %2592
        %2596 = vrot.lane.b32.xlu0 %v2449, 64
        %v2597 = vpop.permute.xlu0 %2596
        %2600 = vrot.lane.b32.xlu0 %v2450, 96
        %v2601 = vpop.permute.xlu0 %2600
        %2604 = vrot.lane.b32.xlu0 %v2452, 32
        %v2605 = vpop.permute.xlu0 %2604
        %2608 = vrot.lane.b32.xlu0 %v2453, 64
        %v2609 = vpop.permute.xlu0 %2608
        %2612 = vrot.lane.b32.xlu0 %v2454, 96
        %v2613 = vpop.permute.xlu0 %2612
        %2616 = vrot.lane.b32.xlu0 %v2584, 32
        %v2617 = vpop.permute.xlu0 %2616
        %2620 = vrot.lane.b32.xlu0 %v2585, 64
        %v2621 = vpop.permute.xlu0 %2620
        %2624 = vrot.lane.b32.xlu0 %v2586, 96
        %v2625 = vpop.permute.xlu0 %2624
        %2628 = vrot.lane.b32.xlu0 %v2588, 32
        %v2629 = vpop.permute.xlu0 %2628
        %2632 = vrot.lane.b32.xlu0 %v2589, 64
        %v2633 = vpop.permute.xlu0 %2632
        %2636 = vrot.lane.b32.xlu0 %v2590, 96
        %v2637 = vpop.permute.xlu0 %2636
        %v2639 = vsel %vm939, %v2447, %v2593
        %vm2640 = vcmask 523264
        %v2641 = vsel %vm2640, %v2639, %v2597
        %vm2642 = vcmask 785408
        %v2643 = vsel %vm2642, %v2641, %v2601
        %v2644 = vsel %vm939, %v2451, %v2605
        %v2645 = vsel %vm2640, %v2644, %v2609
        %v2646 = vsel %vm2642, %v2645, %v2613
        %v2647 = vsel %vm939, %v2583, %v2617
        %v2648 = vsel %vm2640, %v2647, %v2621
        %v2649 = vsel %vm2642, %v2648, %v2625
        %v2650 = vsel %vm939, %v2587, %v2629
        %v2651 = vsel %vm2640, %v2650, %v2633
        %v2652 = vsel %vm2642, %v2651, %v2637
        %2653 = vst [vmem:[%s460] sm:$0xff] %v2643
        %2654 = vst [vmem:[%s460 + $0x8] sm:$0xff] %v2646
        %2655 = vst [vmem:[%s460 + $0x10] sm:$0xff] %v2649
        %2656 = vst [vmem:[%s460 + $0x18] sm:$0xff] %v2652
        %v2657 = vcombine.low %v1621, %v1625
        %v2658 = vcombine.high %v1621, %v1625
        %v2660 = vunpack.c.l.s4 1983009808
        %v2661 = vunpack.c.0.s8 %v2660
        %v2662 = vlaneseq
        %v2663 = vshrl.u32 %v2662, 7
        %v2664 = vsub.s32 %v2661, %v2663
        %v2665 = vrot.slane %v2657, %v2664
        %v2667 = vunpack.c.l.s4 1983009808
        %v2668 = vunpack.c.0.s8 %v2667
        %v2669 = vlaneseq
        %v2670 = vshrl.u32 %v2669, 7
        %v2671 = vsub.s32 %v2668, %v2670
        %v2672 = vrot.slane %v2658, %v2671
        %v2673 = vcombine.low %v1623, %v1627
        %v2674 = vcombine.high %v1623, %v1627
        %v2676 = vunpack.c.l.s4 1983009808
        %v2677 = vunpack.c.0.s8 %v2676
        %v2678 = vlaneseq
        %v2679 = vshrl.u32 %v2678, 7
        %v2680 = vsub.s32 %v2677, %v2679
        %v2681 = vrot.slane %v2673, %v2680
        %v2683 = vunpack.c.l.s4 1983009808
        %v2684 = vunpack.c.0.s8 %v2683
        %v2685 = vlaneseq
        %v2686 = vshrl.u32 %v2685, 7
        %v2687 = vsub.s32 %v2684, %v2686
        %v2688 = vrot.slane %v2674, %v2687
        %v2689 = vcombine.low %v1629, %v1633
        %v2690 = vcombine.high %v1629, %v1633
        %v2692 = vunpack.c.l.s4 1983009808
        %v2693 = vunpack.c.0.s8 %v2692
        %v2694 = vlaneseq
        %v2695 = vshrl.u32 %v2694, 7
        %v2696 = vsub.s32 %v2693, %v2695
        %v2697 = vrot.slane %v2689, %v2696
        %v2699 = vunpack.c.l.s4 1983009808
        %v2700 = vunpack.c.0.s8 %v2699
        %v2701 = vlaneseq
        %v2702 = vshrl.u32 %v2701, 7
        %v2703 = vsub.s32 %v2700, %v2702
        %v2704 = vrot.slane %v2690, %v2703
        %v2705 = vcombine.low %v1631, %v1635
        %v2706 = vcombine.high %v1631, %v1635
        %v2708 = vunpack.c.l.s4 1983009808
        %v2709 = vunpack.c.0.s8 %v2708
        %v2710 = vlaneseq
        %v2711 = vshrl.u32 %v2710, 7
        %v2712 = vsub.s32 %v2709, %v2711
        %v2713 = vrot.slane %v2705, %v2712
        %v2715 = vunpack.c.l.s4 1983009808
        %v2716 = vunpack.c.0.s8 %v2715
        %v2717 = vlaneseq
        %v2718 = vshrl.u32 %v2717, 7
        %v2719 = vsub.s32 %v2716, %v2718
        %v2720 = vrot.slane %v2706, %v2719
        %v2721 = vcombine.low %v2665, %v2681
        %v2722 = vcombine.high %v2665, %v2681
        %v2724 = vunpack.c.l.s4 1934713408
        %v2725 = vunpack.c.0.s8 %v2724
        %v2726 = vlaneseq
        %v2727 = vshrl.u32 %v2726, 7
        %v2728 = vsub.s32 %v2725, %v2727
        %v2729 = vrot.slane %v2721, %v2728
        %v2731 = vunpack.c.l.s4 1934713408
        %v2732 = vunpack.c.0.s8 %v2731
        %v2733 = vlaneseq
        %v2734 = vshrl.u32 %v2733, 7
        %v2735 = vsub.s32 %v2732, %v2734
        %v2736 = vrot.slane %v2722, %v2735
        %v2737 = vcombine.low %v2672, %v2688
        %v2738 = vcombine.high %v2672, %v2688
        %v2740 = vunpack.c.l.s4 1934713408
        %v2741 = vunpack.c.0.s8 %v2740
        %v2742 = vlaneseq
        %v2743 = vshrl.u32 %v2742, 7
        %v2744 = vsub.s32 %v2741, %v2743
        %v2745 = vrot.slane %v2737, %v2744
        %v2747 = vunpack.c.l.s4 1934713408
        %v2748 = vunpack.c.0.s8 %v2747
        %v2749 = vlaneseq
        %v2750 = vshrl.u32 %v2749, 7
        %v2751 = vsub.s32 %v2748, %v2750
        %v2752 = vrot.slane %v2738, %v2751
        %v2753 = vcombine.low %v2697, %v2713
        %v2754 = vcombine.high %v2697, %v2713
        %v2756 = vunpack.c.l.s4 1934713408
        %v2757 = vunpack.c.0.s8 %v2756
        %v2758 = vlaneseq
        %v2759 = vshrl.u32 %v2758, 7
        %v2760 = vsub.s32 %v2757, %v2759
        %v2761 = vrot.slane %v2753, %v2760
        %v2763 = vunpack.c.l.s4 1934713408
        %v2764 = vunpack.c.0.s8 %v2763
        %v2765 = vlaneseq
        %v2766 = vshrl.u32 %v2765, 7
        %v2767 = vsub.s32 %v2764, %v2766
        %v2768 = vrot.slane %v2754, %v2767
        %v2769 = vcombine.low %v2704, %v2720
        %v2770 = vcombine.high %v2704, %v2720
        %v2772 = vunpack.c.l.s4 1934713408
        %v2773 = vunpack.c.0.s8 %v2772
        %v2774 = vlaneseq
        %v2775 = vshrl.u32 %v2774, 7
        %v2776 = vsub.s32 %v2773, %v2775
        %v2777 = vrot.slane %v2769, %v2776
        %v2779 = vunpack.c.l.s4 1934713408
        %v2780 = vunpack.c.0.s8 %v2779
        %v2781 = vlaneseq
        %v2782 = vshrl.u32 %v2781, 7
        %v2783 = vsub.s32 %v2780, %v2782
        %v2784 = vrot.slane %v2770, %v2783
        %v2785 = vcombine.low %v2729, %v2761
        %v2786 = vcombine.high %v2729, %v2761
        %v2787 = vcombine.low %v2736, %v2768
        %v2788 = vcombine.high %v2736, %v2768
        %v2789 = vcombine.low %v2745, %v2777
        %v2790 = vcombine.high %v2745, %v2777
        %v2791 = vcombine.low %v2752, %v2784
        %v2792 = vcombine.high %v2752, %v2784
        %v2793 = vcombine.low %v1622, %v1626
        %v2794 = vcombine.high %v1622, %v1626
        %v2796 = vunpack.c.l.s4 1983009808
        %v2797 = vunpack.c.0.s8 %v2796
        %v2798 = vlaneseq
        %v2799 = vshrl.u32 %v2798, 7
        %v2800 = vsub.s32 %v2797, %v2799
        %v2801 = vrot.slane %v2793, %v2800
        %v2803 = vunpack.c.l.s4 1983009808
        %v2804 = vunpack.c.0.s8 %v2803
        %v2805 = vlaneseq
        %v2806 = vshrl.u32 %v2805, 7
        %v2807 = vsub.s32 %v2804, %v2806
        %v2808 = vrot.slane %v2794, %v2807
        %v2809 = vcombine.low %v1624, %v1628
        %v2810 = vcombine.high %v1624, %v1628
        %v2812 = vunpack.c.l.s4 1983009808
        %v2813 = vunpack.c.0.s8 %v2812
        %v2814 = vlaneseq
        %v2815 = vshrl.u32 %v2814, 7
        %v2816 = vsub.s32 %v2813, %v2815
        %v2817 = vrot.slane %v2809, %v2816
        %v2819 = vunpack.c.l.s4 1983009808
        %v2820 = vunpack.c.0.s8 %v2819
        %v2821 = vlaneseq
        %v2822 = vshrl.u32 %v2821, 7
        %v2823 = vsub.s32 %v2820, %v2822
        %v2824 = vrot.slane %v2810, %v2823
        %v2825 = vcombine.low %v1630, %v1634
        %v2826 = vcombine.high %v1630, %v1634
        %v2828 = vunpack.c.l.s4 1983009808
        %v2829 = vunpack.c.0.s8 %v2828
        %v2830 = vlaneseq
        %v2831 = vshrl.u32 %v2830, 7
        %v2832 = vsub.s32 %v2829, %v2831
        %v2833 = vrot.slane %v2825, %v2832
        %v2835 = vunpack.c.l.s4 1983009808
        %v2836 = vunpack.c.0.s8 %v2835
        %v2837 = vlaneseq
        %v2838 = vshrl.u32 %v2837, 7
        %v2839 = vsub.s32 %v2836, %v2838
        %v2840 = vrot.slane %v2826, %v2839
        %v2841 = vcombine.low %v1632, %v1636
        %v2842 = vcombine.high %v1632, %v1636
        %v2844 = vunpack.c.l.s4 1983009808
        %v2845 = vunpack.c.0.s8 %v2844
        %v2846 = vlaneseq
        %v2847 = vshrl.u32 %v2846, 7
        %v2848 = vsub.s32 %v2845, %v2847
        %v2849 = vrot.slane %v2841, %v2848
        %v2851 = vunpack.c.l.s4 1983009808
        %v2852 = vunpack.c.0.s8 %v2851
        %v2853 = vlaneseq
        %v2854 = vshrl.u32 %v2853, 7
        %v2855 = vsub.s32 %v2852, %v2854
        %v2856 = vrot.slane %v2842, %v2855
        %v2857 = vcombine.low %v2801, %v2817
        %v2858 = vcombine.high %v2801, %v2817
        %v2860 = vunpack.c.l.s4 1934713408
        %v2861 = vunpack.c.0.s8 %v2860
        %v2862 = vlaneseq
        %v2863 = vshrl.u32 %v2862, 7
        %v2864 = vsub.s32 %v2861, %v2863
        %v2865 = vrot.slane %v2857, %v2864
        %v2867 = vunpack.c.l.s4 1934713408
        %v2868 = vunpack.c.0.s8 %v2867
        %v2869 = vlaneseq
        %v2870 = vshrl.u32 %v2869, 7
        %v2871 = vsub.s32 %v2868, %v2870
        %v2872 = vrot.slane %v2858, %v2871
        %v2873 = vcombine.low %v2808, %v2824
        %v2874 = vcombine.high %v2808, %v2824
        %v2876 = vunpack.c.l.s4 1934713408
        %v2877 = vunpack.c.0.s8 %v2876
        %v2878 = vlaneseq
        %v2879 = vshrl.u32 %v2878, 7
        %v2880 = vsub.s32 %v2877, %v2879
        %v2881 = vrot.slane %v2873, %v2880
        %v2883 = vunpack.c.l.s4 1934713408
        %v2884 = vunpack.c.0.s8 %v2883
        %v2885 = vlaneseq
        %v2886 = vshrl.u32 %v2885, 7
        %v2887 = vsub.s32 %v2884, %v2886
        %v2888 = vrot.slane %v2874, %v2887
        %v2889 = vcombine.low %v2833, %v2849
        %v2890 = vcombine.high %v2833, %v2849
        %v2892 = vunpack.c.l.s4 1934713408
        %v2893 = vunpack.c.0.s8 %v2892
        %v2894 = vlaneseq
        %v2895 = vshrl.u32 %v2894, 7
        %v2896 = vsub.s32 %v2893, %v2895
        %v2897 = vrot.slane %v2889, %v2896
        %v2899 = vunpack.c.l.s4 1934713408
        %v2900 = vunpack.c.0.s8 %v2899
        %v2901 = vlaneseq
        %v2902 = vshrl.u32 %v2901, 7
        %v2903 = vsub.s32 %v2900, %v2902
        %v2904 = vrot.slane %v2890, %v2903
        %v2905 = vcombine.low %v2840, %v2856
        %v2906 = vcombine.high %v2840, %v2856
        %v2908 = vunpack.c.l.s4 1934713408
        %v2909 = vunpack.c.0.s8 %v2908
        %v2910 = vlaneseq
        %v2911 = vshrl.u32 %v2910, 7
        %v2912 = vsub.s32 %v2909, %v2911
        %v2913 = vrot.slane %v2905, %v2912
        %v2915 = vunpack.c.l.s4 1934713408
        %v2916 = vunpack.c.0.s8 %v2915
        %v2917 = vlaneseq
        %v2918 = vshrl.u32 %v2917, 7
        %v2919 = vsub.s32 %v2916, %v2918
        %v2920 = vrot.slane %v2906, %v2919
        %v2921 = vcombine.low %v2865, %v2897
        %v2922 = vcombine.high %v2865, %v2897
        %v2923 = vcombine.low %v2872, %v2904
        %v2924 = vcombine.high %v2872, %v2904
        %v2925 = vcombine.low %v2881, %v2913
        %v2926 = vcombine.high %v2881, %v2913
        %v2927 = vcombine.low %v2888, %v2920
        %v2928 = vcombine.high %v2888, %v2920
        %2930 = vrot.lane.b32.xlu0 %v2786, 24
        %v2931 = vpop.permute.xlu0 %2930
        %2934 = vrot.lane.b32.xlu0 %v2787, 48
        %v2935 = vpop.permute.xlu0 %2934
        %2938 = vrot.lane.b32.xlu0 %v2788, 72
        %v2939 = vpop.permute.xlu0 %2938
        %2942 = vrot.lane.b32.xlu0 %v2789, 96
        %v2943 = vpop.permute.xlu0 %2942
        %2946 = vrot.lane.b32.xlu0 %v2790, 120
        %v2947 = vpop.permute.xlu0 %2946
        %2950 = vrot.lane.b32.xlu0 %v2791, 16
        %v2951 = vpop.permute.xlu0 %2950
        %2954 = vrot.lane.b32.xlu0 %v2792, 40
        %v2955 = vpop.permute.xlu0 %2954
        %2958 = vrot.lane.b32.xlu0 %v2921, 64
        %v2959 = vpop.permute.xlu0 %2958
        %2962 = vrot.lane.b32.xlu0 %v2922, 88
        %v2963 = vpop.permute.xlu0 %2962
        %2966 = vrot.lane.b32.xlu0 %v2923, 112
        %v2967 = vpop.permute.xlu0 %2966
        %2970 = vrot.lane.b32.xlu0 %v2924, 8
        %v2971 = vpop.permute.xlu0 %2970
        %2974 = vrot.lane.b32.xlu0 %v2925, 32
        %v2975 = vpop.permute.xlu0 %2974
        %2978 = vrot.lane.b32.xlu0 %v2926, 56
        %v2979 = vpop.permute.xlu0 %2978
        %2982 = vrot.lane.b32.xlu0 %v2927, 80
        %v2983 = vpop.permute.xlu0 %2982
        %2986 = vrot.lane.b32.xlu0 %v2928, 104
        %v2987 = vpop.permute.xlu0 %2986
        %v2989 = vsel %vm1444, %v2785, %v2931
        %vm2990 = vcmask 392192
        %v2991 = vsel %vm2990, %v2989, %v2935
        %vm2992 = vcmask 588800
        %v2993 = vsel %vm2992, %v2991, %v2939
        %v2994 = vsel %vm2642, %v2993, %v2943
        %vm2995 = vcmask 982016
        %v2996 = vsel %vm2995, %v2994, %v2947
        %vm2997 = vcmask 130048
        %v2998 = vsel %vm2997, %v2947, %v2951
        %vm2999 = vcmask 326656
        %v3000 = vsel %vm2999, %v2998, %v2955
        %v3001 = vsel %vm2640, %v3000, %v2959
        %vm3002 = vcmask 719872
        %v3003 = vsel %vm3002, %v3001, %v2963
        %vm3004 = vcmask 916480
        %v3005 = vsel %vm3004, %v3003, %v2967
        %vm3006 = vcmask 64512
        %v3007 = vsel %vm3006, %v2967, %v2971
        %v3008 = vsel %vm939, %v3007, %v2975
        %vm3009 = vcmask 457728
        %v3010 = vsel %vm3009, %v3008, %v2979
        %vm3011 = vcmask 654336
        %v3012 = vsel %vm3011, %v3010, %v2983
        %vm3013 = vcmask 850944
        %v3014 = vsel %vm3013, %v3012, %v2987
        %3015 = vst [vmem:[%s467] sm:$0xff] %v2996
        %3016 = vst [vmem:[%s467 + $0x8] sm:$0xff] %v3005
        %3017 = vst [vmem:[%s467 + $0x10] sm:$0xff] %v3014
        %s3018 = sand.u32 %s221, 1
        %s3019 = scalar_lea.sflag [#allocation5], %s3018
        %s3020 = sand.u32 %s221, 1
        %s3021 = smul.addr %s3020, 32
        %s3022 = scalar_lea.vmem [#allocation12], %s3021
        %s3023 = sand.u32 %s249, 1
        %s3024 = scalar_lea.sflag [#allocation14], %s3023
        %s3025 = sand.u32 %s249, 1
        %s3026 = smul.addr %s3025, 24
        %s3027 = scalar_lea.vmem [#allocation13], %s3026
        // Predicated region
        $region73: #{tpu_custom_call.1} parent=47 // pred_check
          %p3028 = pneg %p231
        $region74: #{tpu_custom_call.1} parent=47 // pred_check_branch
          %3030 = sbr.rel (%p3028) target = $region76
        $region75: #{tpu_custom_call.1} parent=47 // pred_region
          %s3031 = smul.u32 4, %s38
          %s3033 = ssub.s32 512, 512
          %3034 = vsyncadd %s3019, %s3033
          %s3035 = smul.addr %s37, 4
          %s3036 = sadd.s32 %s3031, %s3035
          %s3037 = smul.addr %s3036, 128
          %s3038 = scalar_lea.hbm %s7, %s3037
          %s3040 = sshll.u32 %s3022, 4
          %s3041 = int_to_ptr.vmem [resolvable:$true] %s3040
          %3043 = dma.vmem_to_hbm [thread:$0]  %s3041, 512, %s3038, %s3019
        $region76: #{tpu_custom_call.1} parent=47 // pred_fallthru
          _
        // Predicated region
        $region77: #{tpu_custom_call.1} parent=47 // pred_check
          %p3044 = pneg %p259
        $region78: #{tpu_custom_call.1} parent=47 // pred_check_branch
          %3046 = sbr.rel (%p3044) target = $region80
        $region79: #{tpu_custom_call.1} parent=47 // pred_region
          %s3047 = smul.u32 3, %s38
          %s3049 = ssub.s32 384, 384
          %3050 = vsyncadd %s3024, %s3049
          %s3051 = smul.addr %s37, 3
          %s3052 = sadd.s32 %s3047, %s3051
          %s3053 = smul.addr %s3052, 128
          %s3054 = scalar_lea.hbm %s8, %s3053
          %s3056 = sshll.u32 %s3027, 4
          %s3057 = int_to_ptr.vmem [resolvable:$true] %s3056
          %3059 = dma.vmem_to_hbm [thread:$0]  %s3057, 384, %s3054, %s3024
        $region80: #{tpu_custom_call.1} parent=47 // pred_fallthru
          _
      $region48: #{tpu_custom_call.1} parent=5 // pred_fallthru
        _
      %p3060 = scmp.le.s32.totalorder 2, %s28
      // Predicated region
      $region81: #{tpu_custom_call.1} parent=5 // pred_check
        %p3061 = pneg %p3060
      $region82: #{tpu_custom_call.1} parent=5 // pred_check_branch
        %3063 = sbr.rel (%p3061) target = $region84
      $region83: #{tpu_custom_call.1} parent=5 // pred_region
        %s3064 = ssub.s32 %s28, 2
        // Predicated region
        $region85: #{tpu_custom_call.1} parent=83 // pred_check
          %p3065 = pneg %p237
        $region86: #{tpu_custom_call.1} parent=83 // pred_check_branch
          %3067 = sbr.rel (%p3065) target = $region88
        $region87: #{tpu_custom_call.1} parent=83 // pred_region
          %s3068 = sand.u32 %s222, 1
          %s3069 = scalar_lea.sflag [#allocation5], %s3068
          %s3070 = sand.u32 %s222, 1
          %s3071 = smul.addr %s3070, 32
          %s3072 = scalar_lea.vmem [#allocation12], %s3071
          %3073 = dma.done %s3069, 512
        $region88: #{tpu_custom_call.1} parent=83 // pred_fallthru
          _
        // Predicated region
        $region89: #{tpu_custom_call.1} parent=83 // pred_check
          %p3074 = pneg %p265
        $region90: #{tpu_custom_call.1} parent=83 // pred_check_branch
          %3076 = sbr.rel (%p3074) target = $region92
        $region91: #{tpu_custom_call.1} parent=83 // pred_region
          %s3077 = sand.u32 %s250, 1
          %s3078 = scalar_lea.sflag [#allocation14], %s3077
          %s3079 = sand.u32 %s250, 1
          %s3080 = smul.addr %s3079, 24
          %s3081 = scalar_lea.vmem [#allocation13], %s3080
          %3082 = dma.done %s3078, 384
        $region92: #{tpu_custom_call.1} parent=83 // pred_fallthru
          _
      $region84: #{tpu_custom_call.1} parent=5 // pred_fallthru
        _
    $region6: #{tpu_custom_call.1} parent=1 // loop_footer
      %s32 = sadd.s32 1, %s28
    $region7: #{tpu_custom_call.1} parent=1 // loop_footer_branch
      %27 = sbr.rel target = $region3
    $region8: #{tpu_custom_call.1} parent=1 // loop_exit
      _
    %3083 = vsyncpa [#allocation4], 1
    %s3084 = scalar_lea.sflag [#allocation4], 1
    %3085 = vsyncpa %s3084, 1
    %3086 = vsyncpa [#allocation7], 1
    %s3087 = scalar_lea.sflag [#allocation7], 1
    %3088 = vsyncpa %s3087, 1
    %3089 = vsyncpa [#allocation10], 1
    %3090 = vsyncpa [#allocation5], 1
    %s3091 = scalar_lea.sflag [#allocation5], 1
    %3092 = vsyncpa %s3091, 1
    %3093 = vsyncpa [#allocation14], 1
    %s3094 = scalar_lea.sflag [#allocation14], 1
    %3095 = vsyncpa %s3094, 1

</llo_original>
